<compile_context>
chip_gen: v7x
topology: tpu7x:2x2x1
jax: 0.10.0
libtpu: 0.0.40
codegen_flags: <defaults>
</compile_context>

<pallas_src>
import functools

import jax
import jax.numpy as jnp
from jax.experimental import pallas as pl
from jax.experimental.pallas import tpu as pltpu


def _round_up(x, m):
    return (x + m - 1) // m * m


def _baseconv_kernel(x_ref, w_ref, scale_ref, shift_ref, o_ref, *,
                     K, Wq, TM, use_relu, mxu_dtype):
    """One (batch, Cout-tile, row-tile) block of the flattened convolution.

    x_ref:     (R, Cin)            flattened zero-padded image (resident, f32)
    w_ref:     (K*K, Cin, TCout)   per-tap weights (bf16)
    scale_ref: (1, TCout)          fused scale                        (f32)
    shift_ref: (1, TCout)          fused shift (conv bias + BN folded) (f32)
    o_ref:     (TM, TCout)         output row tile (lane-dense)
    """
    TCout = o_ref.shape[-1]
    base = pl.multiple_of(pl.program_id(2) * TM, TM)

    acc = jnp.zeros((TM, TCout), jnp.float32)          # 16 vregs at 128x128
    # Static K*K tap loop: each tap is a contiguous (TM, Cin) row window of the
    # flattened image times a (Cin, TCout) weight -> bf16 MXU matmul, f32 acc.
    for kh in range(K):
        for kw in range(K):
            off = kh * Wq + kw
            lhs = x_ref[pl.ds(base + off, TM), :].astype(mxu_dtype)
            acc = acc + jnp.dot(lhs, w_ref[kh * K + kw],
                                preferred_element_type=jnp.float32)

    acc = acc * scale_ref[...] + shift_ref[...]        # bias + BN, fused (f32)
    if use_relu:
        acc = jnp.maximum(acc, 0.0)
    o_ref[...] = acc.astype(o_ref.dtype)


def base_conv(x_nchw, weight, bias, *, bn_params=None, activation=None,
              mxu_dtype=jnp.bfloat16, tile_rows=128, tile_cout=128):
    """Forward pass of BaseConv (Conv2d + optional BN(eval) + optional ReLU).

    x_nchw : (N, Cin, H, W)      activations (PyTorch NCHW layout)
    weight : (Cout, Cin, K, K)   PyTorch Conv2d weight layout
    bias   : (Cout,)
    bn_params : None or dict(gamma, beta, running_mean, running_var, eps)
    activation : None or "relu"
    """
    N, Cin, H, W = x_nchw.shape
    Cout, Cin_w, K, K2 = weight.shape
    assert Cin_w == Cin and K == K2
    assert K % 2 == 1, "only odd kernels give 'same' output with padding=K//2"
    pad = K // 2
    use_relu = activation == "relu"
    out_dtype = x_nchw.dtype

    # ---- flattened-image geometry -------------------------------------------
    Wq = W + 2 * pad                        # padded row width = flat row stride
    M = H * Wq                              # flat rows holding real outputs
    TM = tile_rows if M >= tile_rows else _round_up(M, 8)
    n_row_tiles = pl.cdiv(M, TM)
    M_pad = n_row_tiles * TM                # rows actually computed / stored
    # enough flat input rows for the deepest tap of the last (padded) row tile
    R = _round_up(M_pad + (K - 1) * Wq + (K - 1), Wq)
    Hq = R // Wq                            # padded-image height (>= H + 2*pad)

    TCout = tile_cout
    Coutp = _round_up(max(Cout, TCout), TCout)   # lane-dense output channels
    n_cout_tiles = Coutp // TCout

    # ---- wrapper-side glue (XLA fuses this): layout, pad, param fusion ------
    x = jnp.transpose(x_nchw, (0, 2, 3, 1))                          # NHWC
    x = jnp.pad(x, ((0, 0), (pad, Hq - H - pad), (pad, Wq - W - pad), (0, 0)))
    x = x.reshape(N, R, Cin)                                         # flat rows

    w = jnp.transpose(weight, (2, 3, 1, 0)).reshape(K * K, Cin, Cout)
    w = jnp.pad(w, ((0, 0), (0, 0), (0, Coutp - Cout))).astype(mxu_dtype)

    bias = bias.astype(jnp.float32)
    if bn_params is not None:
        eps = bn_params["eps"]
        scale = bn_params["gamma"].astype(jnp.float32) * jax.lax.rsqrt(
            bn_params["running_var"].astype(jnp.float32) + eps)
        shift = (bn_params["beta"].astype(jnp.float32)
                 - bn_params["running_mean"].astype(jnp.float32) * scale
                 + bias * scale)             # conv bias folded into the BN shift
    else:
        scale = jnp.ones((Cout,), jnp.float32)
        shift = bias
    scale = jnp.pad(scale, (0, Coutp - Cout)).reshape(1, Coutp)
    shift = jnp.pad(shift, (0, Coutp - Cout)).reshape(1, Coutp)

    kernel = functools.partial(_baseconv_kernel, K=K, Wq=Wq, TM=TM,
                               use_relu=use_relu, mxu_dtype=mxu_dtype)

    out_flat = pl.pallas_call(
        kernel,
        out_shape=jax.ShapeDtypeStruct((N, M_pad, Coutp), out_dtype),
        grid_spec=pltpu.PrefetchScalarGridSpec(
            num_scalar_prefetch=0,
            grid=(N, n_cout_tiles, n_row_tiles),
            in_specs=[
                # full flattened image: block index constant along c/m -> resident
                pl.BlockSpec((None, R, Cin), lambda n, c, m: (n, 0, 0)),
                pl.BlockSpec((K * K, Cin, TCout), lambda n, c, m: (0, 0, c)),
                pl.BlockSpec((1, TCout), lambda n, c, m: (0, c)),
                pl.BlockSpec((1, TCout), lambda n, c, m: (0, c)),
            ],
            out_specs=pl.BlockSpec((None, TM, TCout), lambda n, c, m: (n, m, c)),
        ),
        compiler_params=pltpu.CompilerParams(
            dimension_semantics=("parallel", "parallel", "parallel")),
        # VMEM use is tiny here; default scoped limit is sufficient on v5e/v6e/v7x.
    )(x, w, scale, shift)

    # un-flatten, drop row / column / channel padding, back to NCHW
    out = out_flat[:, :M, :Cout].reshape(N, H, Wq, Cout)[:, :, :W, :]
    return jnp.transpose(out, (0, 3, 1, 2))


def _reference(x_nchw, weight, bias, bn_params, activation,
               mxu_dtype=jnp.bfloat16):
    """Pure-JAX reference with the same bf16-operand / f32-accumulate numerics."""
    pad = weight.shape[-1] // 2
    out = jax.lax.conv_general_dilated(
        x_nchw.astype(mxu_dtype), weight.astype(mxu_dtype),
        window_strides=(1, 1), padding=((pad, pad), (pad, pad)),
        dimension_numbers=("NCHW", "OIHW", "NCHW"),
        preferred_element_type=jnp.float32)
    out = out + bias.reshape(1, -1, 1, 1).astype(jnp.float32)
    if bn_params is not None:
        eps = bn_params["eps"]
        scale = bn_params["gamma"] / jnp.sqrt(bn_params["running_var"] + eps)
        shift = bn_params["beta"] - bn_params["running_mean"] * scale
        out = out * scale.reshape(1, -1, 1, 1) + shift.reshape(1, -1, 1, 1)
    if activation == "relu":
        out = jnp.maximum(out, 0.0)
    return out.astype(x_nchw.dtype)


if __name__ == "__main__":
    # BaseConv(in_channels=4, out_channels=8, kernel=3, stride=1,
    #          activation=ReLU, use_bn=True)
    N, Cin, H, W = 2, 4, 16, 16
    Cout, K = 8, 3

    key = jax.random.PRNGKey(0)
    kx, kw, kb, kg, kbt, km, kv = jax.random.split(key, 7)

    x = jax.random.normal(kx, (N, Cin, H, W), jnp.float32)
    weight = jax.random.normal(kw, (Cout, Cin, K, K), jnp.float32) * 0.1
    bias = jax.random.normal(kb, (Cout,), jnp.float32) * 0.1
    bn_params = dict(
        gamma=jax.random.normal(kg, (Cout,), jnp.float32) * 0.1 + 1.0,
        beta=jax.random.normal(kbt, (Cout,), jnp.float32) * 0.1,
        running_mean=jax.random.normal(km, (Cout,), jnp.float32) * 0.1,
        running_var=jax.random.uniform(kv, (Cout,), jnp.float32, 0.5, 1.5),
        eps=1e-5,
    )

    # BN + ReLU path
    out = base_conv(x, weight, bias, bn_params=bn_params, activation="relu")
    out = jax.block_until_ready(out)
    ref = _reference(x, weight, bias, bn_params, "relu")
    assert out.shape == (N, Cout, H, W)
    assert jnp.allclose(out, ref, atol=1e-3, rtol=1e-3), (
        "mismatch vs reference (BN+ReLU), max abs err = %e"
        % float(jnp.max(jnp.abs(out - ref))))

    # plain conv + bias path (no BN, no activation)
    out2 = base_conv(x, weight, bias)
    out2 = jax.block_until_ready(out2)
    ref2 = _reference(x, weight, bias, None, None)
    assert jnp.allclose(out2, ref2, atol=1e-3, rtol=1e-3), (
        "mismatch vs reference (plain conv), max abs err = %e"
        % float(jnp.max(jnp.abs(out2 - ref2))))

    print("KERNEL_OK")
</pallas_src>

<mosaic_0001>
module attributes {stable_mosaic.version = 11 : i64} {
  func.func @_baseconv_kernel(%arg0: i32, %arg1: i32, %arg2: i32, %arg3: memref<1x432x4xf32, #tpu.memory_space<vmem>>, %arg4: memref<9x4x128xbf16, #tpu.memory_space<vmem>>, %arg5: memref<1x128xf32, #tpu.memory_space<vmem>>, %arg6: memref<1x128xf32, #tpu.memory_space<vmem>>, %arg7: memref<1x128x128xf32, #tpu.memory_space<vmem>>) attributes {dimension_semantics = [#tpu.dimension_semantics<parallel>, #tpu.dimension_semantics<parallel>, #tpu.dimension_semantics<parallel>], iteration_bounds = array<i64: 2, 1, 3>, scalar_prefetch = 0 : i64, scratch_operands = 0 : i64, tpu.core_type = #tpu.core_type<tc>, window_params = [{transform_indices = @transform_0, window_bounds = array<i64: 1, 432, 4>}, {transform_indices = @transform_1, window_bounds = array<i64: 9, 4, 128>}, {transform_indices = @transform_2, window_bounds = array<i64: 1, 128>}, {transform_indices = @transform_3, window_bounds = array<i64: 1, 128>}, {transform_indices = @transform_4, window_bounds = array<i64: 1, 128, 128>}]} {
    %c128_i32 = arith.constant 128 : i32
    %0 = arith.muli %arg2, %c128_i32 : i32
    %1 = tpu.assume_multiple %0, 128 : i32
    %cst = arith.constant 0.000000e+00 : f32
    %2 = vector.broadcast %cst : f32 to vector<128x128xf32>
    %c0_i32 = arith.constant 0 : i32
    %3 = arith.addi %1, %c0_i32 : i32
    %c0 = arith.constant 0 : index
    %4 = arith.index_cast %3 : i32 to index
    %c0_0 = arith.constant 0 : index
    %5 = vector.load %arg3[%c0, %4, %c0_0] : memref<1x432x4xf32, #tpu.memory_space<vmem>>, vector<1x128x4xf32>
    %6 = vector.shape_cast %5 : vector<1x128x4xf32> to vector<128x4xf32>
    %7 = arith.truncf %6 : vector<128x4xf32> to vector<128x4xbf16>
    %c0_1 = arith.constant 0 : index
    %c0_2 = arith.constant 0 : index
    %c0_3 = arith.constant 0 : index
    %8 = vector.load %arg4[%c0_1, %c0_2, %c0_3] : memref<9x4x128xbf16, #tpu.memory_space<vmem>>, vector<1x4x128xbf16>
    %9 = vector.shape_cast %8 : vector<1x4x128xbf16> to vector<4x128xbf16>
    %cst_4 = arith.constant dense<0.000000e+00> : vector<128x128xf32>
    %10 = tpu.matmul %7, %9, %cst_4 {dimension_numbers = #tpu.dot_dimension_numbers<[1], [0], [0], [1], [0, 0, 1, 1], [], []>} : vector<128x4xbf16>, vector<4x128xbf16>, vector<128x128xf32> -> vector<128x128xf32>
    %11 = arith.addf %2, %10 : vector<128x128xf32>
    %c1_i32 = arith.constant 1 : i32
    %12 = arith.addi %1, %c1_i32 : i32
    %c0_5 = arith.constant 0 : index
    %13 = arith.index_cast %12 : i32 to index
    %c0_6 = arith.constant 0 : index
    %14 = vector.load %arg3[%c0_5, %13, %c0_6] : memref<1x432x4xf32, #tpu.memory_space<vmem>>, vector<1x128x4xf32>
    %15 = vector.shape_cast %14 : vector<1x128x4xf32> to vector<128x4xf32>
    %16 = arith.truncf %15 : vector<128x4xf32> to vector<128x4xbf16>
    %c1 = arith.constant 1 : index
    %c0_7 = arith.constant 0 : index
    %c0_8 = arith.constant 0 : index
    %17 = vector.load %arg4[%c1, %c0_7, %c0_8] : memref<9x4x128xbf16, #tpu.memory_space<vmem>>, vector<1x4x128xbf16>
    %18 = vector.shape_cast %17 : vector<1x4x128xbf16> to vector<4x128xbf16>
    %cst_9 = arith.constant dense<0.000000e+00> : vector<128x128xf32>
    %19 = tpu.matmul %16, %18, %cst_9 {dimension_numbers = #tpu.dot_dimension_numbers<[1], [0], [0], [1], [0, 0, 1, 1], [], []>} : vector<128x4xbf16>, vector<4x128xbf16>, vector<128x128xf32> -> vector<128x128xf32>
    %20 = arith.addf %11, %19 : vector<128x128xf32>
    %c2_i32 = arith.constant 2 : i32
    %21 = arith.addi %1, %c2_i32 : i32
    %c0_10 = arith.constant 0 : index
    %22 = arith.index_cast %21 : i32 to index
    %c0_11 = arith.constant 0 : index
    %23 = vector.load %arg3[%c0_10, %22, %c0_11] : memref<1x432x4xf32, #tpu.memory_space<vmem>>, vector<1x128x4xf32>
    %24 = vector.shape_cast %23 : vector<1x128x4xf32> to vector<128x4xf32>
    %25 = arith.truncf %24 : vector<128x4xf32> to vector<128x4xbf16>
    %c2 = arith.constant 2 : index
    %c0_12 = arith.constant 0 : index
    %c0_13 = arith.constant 0 : index
    %26 = vector.load %arg4[%c2, %c0_12, %c0_13] : memref<9x4x128xbf16, #tpu.memory_space<vmem>>, vector<1x4x128xbf16>
    %27 = vector.shape_cast %26 : vector<1x4x128xbf16> to vector<4x128xbf16>
    %cst_14 = arith.constant dense<0.000000e+00> : vector<128x128xf32>
    %28 = tpu.matmul %25, %27, %cst_14 {dimension_numbers = #tpu.dot_dimension_numbers<[1], [0], [0], [1], [0, 0, 1, 1], [], []>} : vector<128x4xbf16>, vector<4x128xbf16>, vector<128x128xf32> -> vector<128x128xf32>
    %29 = arith.addf %20, %28 : vector<128x128xf32>
    %c18_i32 = arith.constant 18 : i32
    %30 = arith.addi %1, %c18_i32 : i32
    %c0_15 = arith.constant 0 : index
    %31 = arith.index_cast %30 : i32 to index
    %c0_16 = arith.constant 0 : index
    %32 = vector.load %arg3[%c0_15, %31, %c0_16] : memref<1x432x4xf32, #tpu.memory_space<vmem>>, vector<1x128x4xf32>
    %33 = vector.shape_cast %32 : vector<1x128x4xf32> to vector<128x4xf32>
    %34 = arith.truncf %33 : vector<128x4xf32> to vector<128x4xbf16>
    %c3 = arith.constant 3 : index
    %c0_17 = arith.constant 0 : index
    %c0_18 = arith.constant 0 : index
    %35 = vector.load %arg4[%c3, %c0_17, %c0_18] : memref<9x4x128xbf16, #tpu.memory_space<vmem>>, vector<1x4x128xbf16>
    %36 = vector.shape_cast %35 : vector<1x4x128xbf16> to vector<4x128xbf16>
    %cst_19 = arith.constant dense<0.000000e+00> : vector<128x128xf32>
    %37 = tpu.matmul %34, %36, %cst_19 {dimension_numbers = #tpu.dot_dimension_numbers<[1], [0], [0], [1], [0, 0, 1, 1], [], []>} : vector<128x4xbf16>, vector<4x128xbf16>, vector<128x128xf32> -> vector<128x128xf32>
    %38 = arith.addf %29, %37 : vector<128x128xf32>
    %c19_i32 = arith.constant 19 : i32
    %39 = arith.addi %1, %c19_i32 : i32
    %c0_20 = arith.constant 0 : index
    %40 = arith.index_cast %39 : i32 to index
    %c0_21 = arith.constant 0 : index
    %41 = vector.load %arg3[%c0_20, %40, %c0_21] : memref<1x432x4xf32, #tpu.memory_space<vmem>>, vector<1x128x4xf32>
    %42 = vector.shape_cast %41 : vector<1x128x4xf32> to vector<128x4xf32>
    %43 = arith.truncf %42 : vector<128x4xf32> to vector<128x4xbf16>
    %c4 = arith.constant 4 : index
    %c0_22 = arith.constant 0 : index
    %c0_23 = arith.constant 0 : index
    %44 = vector.load %arg4[%c4, %c0_22, %c0_23] : memref<9x4x128xbf16, #tpu.memory_space<vmem>>, vector<1x4x128xbf16>
    %45 = vector.shape_cast %44 : vector<1x4x128xbf16> to vector<4x128xbf16>
    %cst_24 = arith.constant dense<0.000000e+00> : vector<128x128xf32>
    %46 = tpu.matmul %43, %45, %cst_24 {dimension_numbers = #tpu.dot_dimension_numbers<[1], [0], [0], [1], [0, 0, 1, 1], [], []>} : vector<128x4xbf16>, vector<4x128xbf16>, vector<128x128xf32> -> vector<128x128xf32>
    %47 = arith.addf %38, %46 : vector<128x128xf32>
    %c20_i32 = arith.constant 20 : i32
    %48 = arith.addi %1, %c20_i32 : i32
    %c0_25 = arith.constant 0 : index
    %49 = arith.index_cast %48 : i32 to index
    %c0_26 = arith.constant 0 : index
    %50 = vector.load %arg3[%c0_25, %49, %c0_26] : memref<1x432x4xf32, #tpu.memory_space<vmem>>, vector<1x128x4xf32>
    %51 = vector.shape_cast %50 : vector<1x128x4xf32> to vector<128x4xf32>
    %52 = arith.truncf %51 : vector<128x4xf32> to vector<128x4xbf16>
    %c5 = arith.constant 5 : index
    %c0_27 = arith.constant 0 : index
    %c0_28 = arith.constant 0 : index
    %53 = vector.load %arg4[%c5, %c0_27, %c0_28] : memref<9x4x128xbf16, #tpu.memory_space<vmem>>, vector<1x4x128xbf16>
    %54 = vector.shape_cast %53 : vector<1x4x128xbf16> to vector<4x128xbf16>
    %cst_29 = arith.constant dense<0.000000e+00> : vector<128x128xf32>
    %55 = tpu.matmul %52, %54, %cst_29 {dimension_numbers = #tpu.dot_dimension_numbers<[1], [0], [0], [1], [0, 0, 1, 1], [], []>} : vector<128x4xbf16>, vector<4x128xbf16>, vector<128x128xf32> -> vector<128x128xf32>
    %56 = arith.addf %47, %55 : vector<128x128xf32>
    %c36_i32 = arith.constant 36 : i32
    %57 = arith.addi %1, %c36_i32 : i32
    %c0_30 = arith.constant 0 : index
    %58 = arith.index_cast %57 : i32 to index
    %c0_31 = arith.constant 0 : index
    %59 = vector.load %arg3[%c0_30, %58, %c0_31] : memref<1x432x4xf32, #tpu.memory_space<vmem>>, vector<1x128x4xf32>
    %60 = vector.shape_cast %59 : vector<1x128x4xf32> to vector<128x4xf32>
    %61 = arith.truncf %60 : vector<128x4xf32> to vector<128x4xbf16>
    %c6 = arith.constant 6 : index
    %c0_32 = arith.constant 0 : index
    %c0_33 = arith.constant 0 : index
    %62 = vector.load %arg4[%c6, %c0_32, %c0_33] : memref<9x4x128xbf16, #tpu.memory_space<vmem>>, vector<1x4x128xbf16>
    %63 = vector.shape_cast %62 : vector<1x4x128xbf16> to vector<4x128xbf16>
    %cst_34 = arith.constant dense<0.000000e+00> : vector<128x128xf32>
    %64 = tpu.matmul %61, %63, %cst_34 {dimension_numbers = #tpu.dot_dimension_numbers<[1], [0], [0], [1], [0, 0, 1, 1], [], []>} : vector<128x4xbf16>, vector<4x128xbf16>, vector<128x128xf32> -> vector<128x128xf32>
    %65 = arith.addf %56, %64 : vector<128x128xf32>
    %c37_i32 = arith.constant 37 : i32
    %66 = arith.addi %1, %c37_i32 : i32
    %c0_35 = arith.constant 0 : index
    %67 = arith.index_cast %66 : i32 to index
    %c0_36 = arith.constant 0 : index
    %68 = vector.load %arg3[%c0_35, %67, %c0_36] : memref<1x432x4xf32, #tpu.memory_space<vmem>>, vector<1x128x4xf32>
    %69 = vector.shape_cast %68 : vector<1x128x4xf32> to vector<128x4xf32>
    %70 = arith.truncf %69 : vector<128x4xf32> to vector<128x4xbf16>
    %c7 = arith.constant 7 : index
    %c0_37 = arith.constant 0 : index
    %c0_38 = arith.constant 0 : index
    %71 = vector.load %arg4[%c7, %c0_37, %c0_38] : memref<9x4x128xbf16, #tpu.memory_space<vmem>>, vector<1x4x128xbf16>
    %72 = vector.shape_cast %71 : vector<1x4x128xbf16> to vector<4x128xbf16>
    %cst_39 = arith.constant dense<0.000000e+00> : vector<128x128xf32>
    %73 = tpu.matmul %70, %72, %cst_39 {dimension_numbers = #tpu.dot_dimension_numbers<[1], [0], [0], [1], [0, 0, 1, 1], [], []>} : vector<128x4xbf16>, vector<4x128xbf16>, vector<128x128xf32> -> vector<128x128xf32>
    %74 = arith.addf %65, %73 : vector<128x128xf32>
    %c38_i32 = arith.constant 38 : i32
    %75 = arith.addi %1, %c38_i32 : i32
    %c0_40 = arith.constant 0 : index
    %76 = arith.index_cast %75 : i32 to index
    %c0_41 = arith.constant 0 : index
    %77 = vector.load %arg3[%c0_40, %76, %c0_41] : memref<1x432x4xf32, #tpu.memory_space<vmem>>, vector<1x128x4xf32>
    %78 = vector.shape_cast %77 : vector<1x128x4xf32> to vector<128x4xf32>
    %79 = arith.truncf %78 : vector<128x4xf32> to vector<128x4xbf16>
    %c8 = arith.constant 8 : index
    %c0_42 = arith.constant 0 : index
    %c0_43 = arith.constant 0 : index
    %80 = vector.load %arg4[%c8, %c0_42, %c0_43] : memref<9x4x128xbf16, #tpu.memory_space<vmem>>, vector<1x4x128xbf16>
    %81 = vector.shape_cast %80 : vector<1x4x128xbf16> to vector<4x128xbf16>
    %cst_44 = arith.constant dense<0.000000e+00> : vector<128x128xf32>
    %82 = tpu.matmul %79, %81, %cst_44 {dimension_numbers = #tpu.dot_dimension_numbers<[1], [0], [0], [1], [0, 0, 1, 1], [], []>} : vector<128x4xbf16>, vector<4x128xbf16>, vector<128x128xf32> -> vector<128x128xf32>
    %83 = arith.addf %74, %82 : vector<128x128xf32>
    %c0_45 = arith.constant 0 : index
    %c0_46 = arith.constant 0 : index
    %84 = vector.load %arg5[%c0_45, %c0_46] : memref<1x128xf32, #tpu.memory_space<vmem>>, vector<1x128xf32>
    %85 = vector.broadcast %84 : vector<1x128xf32> to vector<128x128xf32>
    %86 = arith.mulf %83, %85 : vector<128x128xf32>
    %c0_47 = arith.constant 0 : index
    %c0_48 = arith.constant 0 : index
    %87 = vector.load %arg6[%c0_47, %c0_48] : memref<1x128xf32, #tpu.memory_space<vmem>>, vector<1x128xf32>
    %88 = vector.broadcast %87 : vector<1x128xf32> to vector<128x128xf32>
    %89 = arith.addf %86, %88 : vector<128x128xf32>
    %cst_49 = arith.constant 0.000000e+00 : f32
    %90 = vector.broadcast %cst_49 : f32 to vector<128x128xf32>
    %91 = arith.maximumf %89, %90 : vector<128x128xf32>
    %c0_50 = arith.constant 0 : index
    %c0_51 = arith.constant 0 : index
    %c0_52 = arith.constant 0 : index
    %92 = vector.load %arg7[%c0_50, %c0_51, %c0_52] : memref<1x128x128xf32, #tpu.memory_space<vmem>>, vector<1x128x128xf32>
    %93 = vector.shape_cast %92 : vector<1x128x128xf32> to vector<128x128xf32>
    %94 = vector.shape_cast %91 : vector<128x128xf32> to vector<1x128x128xf32>
    tpu.vector_store %arg7[%c0_50, %c0_51, %c0_52], %94 {strides = array<i32>} : memref<1x128x128xf32, #tpu.memory_space<vmem>>, vector<1x128x128xf32>,
    return
  }
  func.func @transform_0(%arg0: i32, %arg1: i32, %arg2: i32) -> (i32, i32, i32) {
    %c0_i32 = arith.constant 0 : i32
    %c0_i32_0 = arith.constant 0 : i32
    %c0_i32_1 = arith.constant 0 : i32
    return %arg0, %c0_i32, %c0_i32_0 : i32, i32, i32
  }
  func.func @transform_1(%arg0: i32, %arg1: i32, %arg2: i32) -> (i32, i32, i32) {
    %c0_i32 = arith.constant 0 : i32
    %c0_i32_0 = arith.constant 0 : i32
    %c0_i32_1 = arith.constant 0 : i32
    return %c0_i32, %c0_i32_0, %arg1 : i32, i32, i32
  }
  func.func @transform_2(%arg0: i32, %arg1: i32, %arg2: i32) -> (i32, i32) {
    %c0_i32 = arith.constant 0 : i32
    %c0_i32_0 = arith.constant 0 : i32
    return %c0_i32, %arg1 : i32, i32
  }
  func.func @transform_3(%arg0: i32, %arg1: i32, %arg2: i32) -> (i32, i32) {
    %c0_i32 = arith.constant 0 : i32
    %c0_i32_0 = arith.constant 0 : i32
    return %c0_i32, %arg1 : i32, i32
  }
  func.func @transform_4(%arg0: i32, %arg1: i32, %arg2: i32) -> (i32, i32, i32) {
    %c0_i32 = arith.constant 0 : i32
    return %arg0, %arg2, %arg1 : i32, i32, i32
  }
}

</mosaic_0001>

<llo_original>
// kernel: tpu_custom_call.1
$region0: #{tpu_custom_call.1}
  #allocation0 [shape = 'u32[]', space=smem, size = 0x4, offset = 0x4, fixed_abs, tag = 'smem constant byte address 0x4 - core index']
  #allocation1 [shape = 'u32[144,128]{1,0:T(1,128)}', space=vmem, size = 0x12000, scoped, tag = 'internal scratch']
  %s0 = inlined_call_operand.vmem [shape: f32[2,432,4], index: 0, kind: input, shape index: {}]
  %s1 = inlined_call_operand.vmem [shape: bf16[9,4,128], index: 1, kind: input, shape index: {}]
  %s2 = inlined_call_operand.vmem [shape: f32[1,128], index: 2, kind: input, shape index: {}]
  %s3 = inlined_call_operand.vmem [shape: f32[1,128], index: 3, kind: input, shape index: {}]
  %s4 = inlined_call_operand.hbm [shape: f32[2,384,128], index: 4, kind: output, shape index: {}]
  %s5 = sld [smem:[#allocation0]]
  $region49: #{tpu_custom_call.1} parent=0
    _
  %s7 = ssub.s32 1, %s5
  %s8 = scalar_select 0, %s7, %s5
  $region1: #{tpu_custom_call.1} parent=0
    #allocation2 [shape = 'u8[131072]{0}', space=vmem, size = 0x20000, scoped, tag = 'output window, operand 0']
    #allocation3 [shape = 's32[2]{0}', space=sflag, size = 0x8, scoped, tag = 'scoped memory for tpu_custom_call.1']
    %9 = vsyncpa [#allocation3], 0
    %s10 = scalar_lea.sflag [#allocation3], 1
    %11 = vsyncpa %s10, 0
    loop: start=0, step=1, limit=8
    $region2: #{tpu_custom_call.1} parent=1 // loop_pre_header
      _
    $region3: #{tpu_custom_call.1} parent=1 // loop_header
      %s13 = sphi 0, %s17
      %p14 = scmp.ge.s32.totalorder %s13, 8
      %s20 = sphi 0, %s39
      %s21 = sphi 0, %s35
      %s22 = sphi 0, %s31
      %s23 = sphi 0, %s20
      %s24 = sphi 0, %s21
      %s25 = sphi 0, %s22
      %s26 = sphi 0, %s23
      %s27 = sphi 0, %s24
      %s28 = sphi 0, %s25
      %s42 = sphi 0, %s44
      %s45 = sphi 0, %s42
      %s46 = sphi 0, %s45
      %s62 = sphi 0, %s46
      %s68 = sphi 0, %s70
      %s71 = sphi 0, %s68
      %s72 = sphi 0, %s71
      %s88 = sphi 0, %s72
      %s94 = sphi 0, %s96
      %s97 = sphi 0, %s94
      %s98 = sphi 0, %s97
      %s114 = sphi 0, %s98
      %s120 = sphi 0, %s122
      %s123 = sphi 0, %s120
      %s124 = sphi 0, %s123
      %s140 = sphi 0, %s124
      %s150 = sphi 0, %s152
      %s153 = sphi 0, %s150
      %s154 = sphi 0, %s153
      %s170 = sphi 0, %s154
    $region4: #{tpu_custom_call.1} parent=1 // loop_header_branch
      %16 = sbr.rel (%p14) target = $region8
    $region5: #{tpu_custom_call.1} parent=1 // loop_body
      %s18 = ssub.s32 %s13, 1
      %s19 = ssub.s32 %s13, 2
      %s29 = sadd.s32 1, %s22
      %p30 = scmp.ge.s32.totalorder %s29, 3
      %s31 = scalar_select %p30, 0, %s29
      %s32 = sadd.s32 1, %s21
      %s33 = scalar_select %p30, %s32, %s21
      %p34 = scmp.ge.s32.totalorder %s33, 1
      %s35 = scalar_select %p34, 0, %s33
      %s36 = sadd.s32 1, %s20
      %s37 = scalar_select %p34, %s36, %s20
      %p38 = scmp.ge.s32.totalorder %s37, 2
      %s39 = scalar_select %p38, 0, %s37
      %s40 = ssub.s32 %s20, %s39
      %p41 = scmp.eq.s32.totalorder %s40, 0
      %s43 = sadd.s32 %s42, 1
      %s44 = scalar_select %p41, %s42, %s43
      %p47 = pneg %p41
      %p48 = scmp.eq.s32.totalorder %s13, 5
      %p49 = por %p47, %p48
      %p50 = scmp.ne.s32.totalorder %s42, %s45
      %p51 = scmp.eq.s32.totalorder %s13, 0
      %p52 = por %p50, %p51
      %p53 = scmp.ne.s32.totalorder %s42, %s45
      %p54 = scmp.eq.s32.totalorder %s18, 5
      %p55 = por %p53, %p54
      %p56 = scmp.ne.s32.totalorder %s45, %s46
      %p57 = scmp.eq.s32.totalorder %s18, 0
      %p58 = por %p56, %p57
      %p59 = scmp.ne.s32.totalorder %s45, %s46
      %p60 = scmp.eq.s32.totalorder %s19, 5
      %p61 = por %p59, %p60
      %p63 = scmp.ne.s32.totalorder %s46, %s62
      %p64 = scmp.eq.s32.totalorder %s19, 0
      %p65 = por %p63, %p64
      %s66 = ssub.s32 %s21, %s35
      %p67 = scmp.eq.s32.totalorder %s66, 0
      %s69 = sadd.s32 %s68, 1
      %s70 = scalar_select %p67, %s68, %s69
      %p73 = pneg %p67
      %p74 = scmp.eq.s32.totalorder %s13, 5
      %p75 = por %p73, %p74
      %p76 = scmp.ne.s32.totalorder %s68, %s71
      %p77 = scmp.eq.s32.totalorder %s13, 0
      %p78 = por %p76, %p77
      %p79 = scmp.ne.s32.totalorder %s68, %s71
      %p80 = scmp.eq.s32.totalorder %s18, 5
      %p81 = por %p79, %p80
      %p82 = scmp.ne.s32.totalorder %s71, %s72
      %p83 = scmp.eq.s32.totalorder %s18, 0
      %p84 = por %p82, %p83
      %p85 = scmp.ne.s32.totalorder %s71, %s72
      %p86 = scmp.eq.s32.totalorder %s19, 5
      %p87 = por %p85, %p86
      %p89 = scmp.ne.s32.totalorder %s72, %s88
      %p90 = scmp.eq.s32.totalorder %s19, 0
      %p91 = por %p89, %p90
      %s92 = ssub.s32 %s21, %s35
      %p93 = scmp.eq.s32.totalorder %s92, 0
      %s95 = sadd.s32 %s94, 1
      %s96 = scalar_select %p93, %s94, %s95
      %p99 = pneg %p93
      %p100 = scmp.eq.s32.totalorder %s13, 5
      %p101 = por %p99, %p100
      %p102 = scmp.ne.s32.totalorder %s94, %s97
      %p103 = scmp.eq.s32.totalorder %s13, 0
      %p104 = por %p102, %p103
      %p105 = scmp.ne.s32.totalorder %s94, %s97
      %p106 = scmp.eq.s32.totalorder %s18, 5
      %p107 = por %p105, %p106
      %p108 = scmp.ne.s32.totalorder %s97, %s98
      %p109 = scmp.eq.s32.totalorder %s18, 0
      %p110 = por %p108, %p109
      %p111 = scmp.ne.s32.totalorder %s97, %s98
      %p112 = scmp.eq.s32.totalorder %s19, 5
      %p113 = por %p111, %p112
      %p115 = scmp.ne.s32.totalorder %s98, %s114
      %p116 = scmp.eq.s32.totalorder %s19, 0
      %p117 = por %p115, %p116
      %s118 = ssub.s32 %s21, %s35
      %p119 = scmp.eq.s32.totalorder %s118, 0
      %s121 = sadd.s32 %s120, 1
      %s122 = scalar_select %p119, %s120, %s121
      %p125 = pneg %p119
      %p126 = scmp.eq.s32.totalorder %s13, 5
      %p127 = por %p125, %p126
      %p128 = scmp.ne.s32.totalorder %s120, %s123
      %p129 = scmp.eq.s32.totalorder %s13, 0
      %p130 = por %p128, %p129
      %p131 = scmp.ne.s32.totalorder %s120, %s123
      %p132 = scmp.eq.s32.totalorder %s18, 5
      %p133 = por %p131, %p132
      %p134 = scmp.ne.s32.totalorder %s123, %s124
      %p135 = scmp.eq.s32.totalorder %s18, 0
      %p136 = por %p134, %p135
      %p137 = scmp.ne.s32.totalorder %s123, %s124
      %p138 = scmp.eq.s32.totalorder %s19, 5
      %p139 = por %p137, %p138
      %p141 = scmp.ne.s32.totalorder %s124, %s140
      %p142 = scmp.eq.s32.totalorder %s19, 0
      %p143 = por %p141, %p142
      %s144 = ssub.s32 %s20, %s39
      %s145 = ssub.s32 %s22, %s31
      %s146 = sor.u32 %s144, %s145
      %s147 = ssub.s32 %s21, %s35
      %s148 = sor.u32 %s146, %s147
      %p149 = scmp.eq.s32.totalorder %s148, 0
      %s151 = sadd.s32 %s150, 1
      %s152 = scalar_select %p149, %s150, %s151
      %p155 = pneg %p149
      %p156 = scmp.eq.s32.totalorder %s13, 5
      %p157 = por %p155, %p156
      %p158 = scmp.ne.s32.totalorder %s150, %s153
      %p159 = scmp.eq.s32.totalorder %s13, 0
      %p160 = por %p158, %p159
      %p161 = scmp.ne.s32.totalorder %s150, %s153
      %p162 = scmp.eq.s32.totalorder %s18, 5
      %p163 = por %p161, %p162
      %p164 = scmp.ne.s32.totalorder %s153, %s154
      %p165 = scmp.eq.s32.totalorder %s18, 0
      %p166 = por %p164, %p165
      %p167 = scmp.ne.s32.totalorder %s153, %s154
      %p168 = scmp.eq.s32.totalorder %s19, 5
      %p169 = por %p167, %p168
      %p171 = scmp.ne.s32.totalorder %s154, %s170
      %p172 = scmp.eq.s32.totalorder %s19, 0
      %p173 = por %p171, %p172
      %p174 = scmp.le.s32.totalorder 1, %s13
      %p175 = scmp.lt.s32.totalorder %s13, 7
      %p176 = pnand %p174, %p175
      %p177 = pneg %p176
      // Predicated region
      $region9: #{tpu_custom_call.1} parent=5 // pred_check
        _
      $region10: #{tpu_custom_call.1} parent=5 // pred_check_branch
        %179 = sbr.rel (%p176) target = $region12
      $region11: #{tpu_custom_call.1} parent=5 // pred_region
        %s180 = ssub.s32 %s13, 1
        // Predicated region
        $region13: #{tpu_custom_call.1} parent=11 // pred_check
          %p181 = pneg %p84
        $region14: #{tpu_custom_call.1} parent=11 // pred_check_branch
          %183 = sbr.rel (%p181) target = $region16
        $region15: #{tpu_custom_call.1} parent=11 // pred_region
          %p184 = scmp.lt.s32.totalorder %s24, 0
          %s185 = scalar_select %p184, %s24, 0
          %s186 = smul.addr %s185, 2
          %s187 = scalar_lea.vmem %s1, %s186
        $region16: #{tpu_custom_call.1} parent=11 // pred_fallthru
          _
        // Predicated region
        $region17: #{tpu_custom_call.1} parent=11 // pred_check
          %p188 = pneg %p110
        $region18: #{tpu_custom_call.1} parent=11 // pred_check_branch
          %190 = sbr.rel (%p188) target = $region20
        $region19: #{tpu_custom_call.1} parent=11 // pred_region
          %p191 = scmp.lt.s32.totalorder %s24, 0
          %s192 = scalar_select %p191, %s24, 0
          %s193 = scalar_lea.vmem %s2, %s192
        $region20: #{tpu_custom_call.1} parent=11 // pred_fallthru
          _
        // Predicated region
        $region21: #{tpu_custom_call.1} parent=11 // pred_check
          %p194 = pneg %p136
        $region22: #{tpu_custom_call.1} parent=11 // pred_check_branch
          %196 = sbr.rel (%p194) target = $region24
        $region23: #{tpu_custom_call.1} parent=11 // pred_region
          %p197 = scmp.lt.s32.totalorder %s24, 0
          %s198 = scalar_select %p197, %s24, 0
          %s199 = scalar_lea.vmem %s3, %s198
        $region24: #{tpu_custom_call.1} parent=11 // pred_fallthru
          _
      $region12: #{tpu_custom_call.1} parent=5 // pred_fallthru
        _
      %p200 = scmp.lt.s32.totalorder %s13, 6
      // Predicated region
      $region25: #{tpu_custom_call.1} parent=5 // pred_check
        %p201 = pneg %p200
      $region26: #{tpu_custom_call.1} parent=5 // pred_check_branch
        %203 = sbr.rel (%p201) target = $region28
      $region27: #{tpu_custom_call.1} parent=5 // pred_region
        // Predicated region
        $region29: #{tpu_custom_call.1} parent=27 // pred_check
          %p204 = pneg %p52
        $region30: #{tpu_custom_call.1} parent=27 // pred_check_branch
          %206 = sbr.rel (%p204) target = $region32
        $region31: #{tpu_custom_call.1} parent=27 // pred_region
          %p207 = scmp.lt.s32.totalorder %s20, 1
          %s208 = scalar_select %p207, %s20, 1
          %s209 = smul.addr %s208, 54
          %s210 = smul.addr %s209, 8
          %s211 = scalar_lea.vmem %s0, %s210
        $region32: #{tpu_custom_call.1} parent=27 // pred_fallthru
          _
      $region28: #{tpu_custom_call.1} parent=5 // pred_fallthru
        _
      %p212 = scmp.le.s32.totalorder 1, %s13
      %p213 = scmp.lt.s32.totalorder %s13, 7
      %p214 = pnand %p212, %p213
      %p215 = pneg %p214
      // Predicated region
      $region33: #{tpu_custom_call.1} parent=5 // pred_check
        _
      $region34: #{tpu_custom_call.1} parent=5 // pred_check_branch
        %217 = sbr.rel (%p214) target = $region36
      $region35: #{tpu_custom_call.1} parent=5 // pred_region
        %s218 = ssub.s32 %s13, 1
        %p219 = scmp.lt.s32.totalorder %s23, 1
        %s220 = scalar_select %p219, %s23, 1
        %s221 = smul.addr %s220, 54
        %s222 = smul.addr %s221, 8
        %s223 = scalar_lea.vmem %s0, %s222
        %p224 = pneg %p58
        %p225 = pneg %p55
        %p226 = scmp.lt.s32.totalorder %s24, 0
        %s227 = scalar_select %p226, %s24, 0
        %s228 = smul.addr %s227, 2
        %s229 = scalar_lea.vmem %s1, %s228
        %p230 = pneg %p84
        %p231 = pneg %p81
        %p232 = scmp.lt.s32.totalorder %s24, 0
        %s233 = scalar_select %p232, %s24, 0
        %s234 = scalar_lea.vmem %s2, %s233
        %p235 = pneg %p110
        %p236 = pneg %p107
        %p237 = scmp.lt.s32.totalorder %s24, 0
        %s238 = scalar_select %p237, %s24, 0
        %s239 = scalar_lea.vmem %s3, %s238
        %p240 = pneg %p136
        %p241 = pneg %p133
        %p242 = pneg %p166
        %p243 = pneg %p163
        %s244 = sand.u32 %s153, 1
        %s245 = scalar_lea.sflag [#allocation3], %s244
        %s246 = sand.u32 %s153, 1
        %s247 = smul.addr %s246, 128
        %s248 = scalar_lea.vmem [#allocation2], %s247
        %p249 = scmp.lt.s32.totalorder %s23, 1
        %s250 = scalar_select %p249, %s23, 1
        %s251 = smul.addr %s250, 54
        %s252 = smul.addr %s251, 8
        %s253 = scalar_lea.vmem %s0, %s252
        %p254 = scmp.lt.s32.totalorder %s24, 0
        %s255 = scalar_select %p254, %s24, 0
        %s256 = smul.addr %s255, 2
        %s257 = scalar_lea.vmem %s1, %s256
        %p258 = scmp.lt.s32.totalorder %s24, 0
        %s259 = scalar_select %p258, %s24, 0
        %s260 = scalar_lea.vmem %s2, %s259
        %p261 = scmp.lt.s32.totalorder %s24, 0
        %s262 = scalar_select %p261, %s24, 0
        %s263 = scalar_lea.vmem %s3, %s262
        %s264 = smul.u32 16, %s25
        %s266 = smul.u32 %s25, 128
        %s267 = scalar_lea.vmem %s253, %s266
        %v268 = vld [vmem:[%s267] sm:$0xff]
        %v269 = vld [vmem:[%s267 + $0x8] sm:$0xff]
        %v270 = vld [vmem:[%s267 + $0x10] sm:$0xff]
        %v271 = vld [vmem:[%s267 + $0x18] sm:$0xff]
        %v272 = vld [vmem:[%s267 + $0x20] sm:$0xff]
        %v273 = vld [vmem:[%s267 + $0x28] sm:$0xff]
        %v274 = vld [vmem:[%s267 + $0x30] sm:$0xff]
        %v275 = vld [vmem:[%s267 + $0x38] sm:$0xff]
        %v276 = vld [vmem:[%s267 + $0x40] sm:$0xff]
        %v277 = vld [vmem:[%s267 + $0x48] sm:$0xff]
        %v278 = vld [vmem:[%s267 + $0x50] sm:$0xff]
        %v279 = vld [vmem:[%s267 + $0x58] sm:$0xff]
        %v280 = vld [vmem:[%s267 + $0x60] sm:$0xff]
        %v281 = vld [vmem:[%s267 + $0x68] sm:$0xff]
        %v282 = vld [vmem:[%s267 + $0x70] sm:$0xff]
        %v283 = vld [vmem:[%s267 + $0x78] sm:$0xff]
        %v284 = vpack.c.bf16 %v269, %v268
        %v285 = vpack.c.bf16 %v271, %v270
        %v286 = vpack.c.bf16 %v273, %v272
        %v287 = vpack.c.bf16 %v275, %v274
        %v288 = vpack.c.bf16 %v277, %v276
        %v289 = vpack.c.bf16 %v279, %v278
        %v290 = vpack.c.bf16 %v281, %v280
        %v291 = vpack.c.bf16 %v283, %v282
        %v292 = vld [vmem:[%s257] sm:$0x3]
        %s293 = sadd.s32 %s266, 1
        %s294 = scalar_lea.vmem %s253, %s293
        %v295 = vld [vmem:[%s294] sm:$0xff]
        %v296 = vld [vmem:[%s294 + $0x8] sm:$0xff]
        %v297 = vld [vmem:[%s294 + $0x10] sm:$0xff]
        %v298 = vld [vmem:[%s294 + $0x18] sm:$0xff]
        %v299 = vld [vmem:[%s294 + $0x20] sm:$0xff]
        %v300 = vld [vmem:[%s294 + $0x28] sm:$0xff]
        %v301 = vld [vmem:[%s294 + $0x30] sm:$0xff]
        %v302 = vld [vmem:[%s294 + $0x38] sm:$0xff]
        %v303 = vld [vmem:[%s294 + $0x40] sm:$0xff]
        %v304 = vld [vmem:[%s294 + $0x48] sm:$0xff]
        %v305 = vld [vmem:[%s294 + $0x50] sm:$0xff]
        %v306 = vld [vmem:[%s294 + $0x58] sm:$0xff]
        %v307 = vld [vmem:[%s294 + $0x60] sm:$0xff]
        %v308 = vld [vmem:[%s294 + $0x68] sm:$0xff]
        %v309 = vld [vmem:[%s294 + $0x70] sm:$0xff]
        %v310 = vld [vmem:[%s294 + $0x78] sm:$0xff]
        %v311 = vpack.c.bf16 %v296, %v295
        %v312 = vpack.c.bf16 %v298, %v297
        %v313 = vpack.c.bf16 %v300, %v299
        %v314 = vpack.c.bf16 %v302, %v301
        %v315 = vpack.c.bf16 %v304, %v303
        %v316 = vpack.c.bf16 %v306, %v305
        %v317 = vpack.c.bf16 %v308, %v307
        %v318 = vpack.c.bf16 %v310, %v309
        %s319 = scalar_lea.vmem %s257, 2
        %v320 = vld [vmem:[%s319] sm:$0x3]
        %vm321 = vcmask 31744
        %v323 = vsel %vm321, %v311, 0
        %v326 = vsel %vm321, %v312, 0
        %v329 = vsel %vm321, %v313, 0
        %v332 = vsel %vm321, %v314, 0
        %v335 = vsel %vm321, %v315, 0
        %v338 = vsel %vm321, %v316, 0
        %v341 = vsel %vm321, %v317, 0
        %v344 = vsel %vm321, %v318, 0
        %vm346 = vcmask 1041408
        %v348 = vsel %vm346, %v320, 0
        %350 = vmatprep.subr.bf16.mxu0 0
        %351 = vmatpush1.bf16.msra.mxu0 %v348
        %352 = vmatprep.subr.bf16.mxu0 0
        %353 = vmatpush1.bf16.msra.mxu0 0
        %354 = vmatprep.subr.bf16.mxu0 0
        %355 = vmatpush1.bf16.msra.mxu0 0
        %356 = vmatprep.subr.bf16.mxu0 0
        %357 = vmatpush1.bf16.msra.mxu0 0
        %358 = vmatprep.subr.bf16.mxu0 0
        %359 = vmatpush1.bf16.msra.mxu0 0
        %360 = vmatprep.subr.bf16.mxu0 0
        %361 = vmatpush1.bf16.msra.mxu0 0
        %362 = vmatprep.subr.bf16.mxu0 0
        %363 = vmatpush1.bf16.msra.mxu0 0
        %364 = vmatprep.subr.bf16.mxu0 0
        %365 = vmatpush1.bf16.msra.mxu0 0
        %366 = vmatprep.subr.bf16.mxu0 0
        %367 = vmatpush1.bf16.msra.mxu0 0
        %368 = vmatprep.subr.bf16.mxu0 0
        %369 = vmatpush1.bf16.msra.mxu0 0
        %370 = vmatprep.subr.bf16.mxu0 0
        %371 = vmatpush1.bf16.msra.mxu0 0
        %372 = vmatprep.subr.bf16.mxu0 0
        %373 = vmatpush1.bf16.msra.mxu0 0
        %374 = vmatprep.subr.bf16.mxu0 0
        %375 = vmatpush1.bf16.msra.mxu0 0
        %376 = vmatprep.subr.bf16.mxu0 0
        %377 = vmatpush1.bf16.msra.mxu0 0
        %378 = vmatprep.subr.bf16.mxu0 0
        %379 = vmatpush1.bf16.msra.mxu0 0
        %380 = vmatprep.subr.bf16.mxu0 0
        %381 = vmatpush1.bf16.msra.mxu0 0
        %382 = vmatprep.mubr.bf16.mxu0 0
        %383 = vmatmul.mubr.bf16.gmra.mrb[0].mxu0 %v323
        %v384 = vpop.f32.mrb[0].mxu0
        %v385 = vadd.f32 0.0, %v384
        %v386 = vpop.f32.mrb[0].mxu0
        %v387 = vpop.f32.mrb[0].mxu0
        %v388 = vadd.f32 0.0, %v387
        %v389 = vpop.f32.mrb[0].mxu0
        %390 = vmatprep.mubr.bf16.mxu0 0
        %391 = vmatmul.mubr.bf16.gmra.mrb[0].mxu0 %v326
        %v392 = vpop.f32.mrb[0].mxu0
        %v393 = vadd.f32 0.0, %v392
        %v394 = vpop.f32.mrb[0].mxu0
        %v395 = vpop.f32.mrb[0].mxu0
        %v396 = vadd.f32 0.0, %v395
        %v397 = vpop.f32.mrb[0].mxu0
        %398 = vmatprep.mubr.bf16.mxu0 0
        %399 = vmatmul.mubr.bf16.gmra.mrb[0].mxu0 %v329
        %v400 = vpop.f32.mrb[0].mxu0
        %v401 = vadd.f32 0.0, %v400
        %v402 = vpop.f32.mrb[0].mxu0
        %v403 = vpop.f32.mrb[0].mxu0
        %v404 = vadd.f32 0.0, %v403
        %v405 = vpop.f32.mrb[0].mxu0
        %406 = vmatprep.mubr.bf16.mxu0 0
        %407 = vmatmul.mubr.bf16.gmra.mrb[0].mxu0 %v332
        %v408 = vpop.f32.mrb[0].mxu0
        %v409 = vadd.f32 0.0, %v408
        %v410 = vpop.f32.mrb[0].mxu0
        %v411 = vpop.f32.mrb[0].mxu0
        %v412 = vadd.f32 0.0, %v411
        %v413 = vpop.f32.mrb[0].mxu0
        %414 = vmatprep.mubr.bf16.mxu0 0
        %415 = vmatmul.mubr.bf16.gmra.mrb[0].mxu0 %v335
        %v416 = vpop.f32.mrb[0].mxu0
        %v417 = vadd.f32 0.0, %v416
        %v418 = vpop.f32.mrb[0].mxu0
        %v419 = vpop.f32.mrb[0].mxu0
        %v420 = vadd.f32 0.0, %v419
        %v421 = vpop.f32.mrb[0].mxu0
        %422 = vmatprep.mubr.bf16.mxu0 0
        %423 = vmatmul.mubr.bf16.gmra.mrb[0].mxu0 %v338
        %v424 = vpop.f32.mrb[0].mxu0
        %v425 = vadd.f32 0.0, %v424
        %v426 = vpop.f32.mrb[0].mxu0
        %v427 = vpop.f32.mrb[0].mxu0
        %v428 = vadd.f32 0.0, %v427
        %v429 = vpop.f32.mrb[0].mxu0
        %430 = vmatprep.mubr.bf16.mxu0 0
        %431 = vmatmul.mubr.bf16.gmra.mrb[0].mxu0 %v341
        %v432 = vpop.f32.mrb[0].mxu0
        %v433 = vadd.f32 0.0, %v432
        %v434 = vpop.f32.mrb[0].mxu0
        %v435 = vpop.f32.mrb[0].mxu0
        %v436 = vadd.f32 0.0, %v435
        %v437 = vpop.f32.mrb[0].mxu0
        %438 = vmatprep.mubr.bf16.mxu0 0
        %439 = vmatmul.mubr.bf16.gmra.mrb[0].mxu0 %v344
        %v440 = vpop.f32.mrb[0].mxu0
        %v441 = vadd.f32 0.0, %v440
        %v442 = vpop.f32.mrb[0].mxu0
        %v443 = vpop.f32.mrb[0].mxu0
        %v444 = vadd.f32 0.0, %v443
        %v445 = vpop.f32.mrb[0].mxu0
        %446 = vdwg.mxu0
        %v448 = vsel %vm321, %v284, 0
        %v451 = vsel %vm321, %v285, 0
        %v454 = vsel %vm321, %v286, 0
        %v457 = vsel %vm321, %v287, 0
        %v460 = vsel %vm321, %v288, 0
        %v463 = vsel %vm321, %v289, 0
        %v466 = vsel %vm321, %v290, 0
        %v469 = vsel %vm321, %v291, 0
        %v472 = vsel %vm346, %v292, 0
        %474 = vmatprep.subr.bf16.mxu0 0
        %475 = vmatpush1.bf16.msra.mxu0 %v472
        %476 = vmatprep.subr.bf16.mxu0 0
        %477 = vmatpush1.bf16.msra.mxu0 0
        %478 = vmatprep.subr.bf16.mxu0 0
        %479 = vmatpush1.bf16.msra.mxu0 0
        %480 = vmatprep.subr.bf16.mxu0 0
        %481 = vmatpush1.bf16.msra.mxu0 0
        %482 = vmatprep.subr.bf16.mxu0 0
        %483 = vmatpush1.bf16.msra.mxu0 0
        %484 = vmatprep.subr.bf16.mxu0 0
        %485 = vmatpush1.bf16.msra.mxu0 0
        %486 = vmatprep.subr.bf16.mxu0 0
        %487 = vmatpush1.bf16.msra.mxu0 0
        %488 = vmatprep.subr.bf16.mxu0 0
        %489 = vmatpush1.bf16.msra.mxu0 0
        %490 = vmatprep.subr.bf16.mxu0 0
        %491 = vmatpush1.bf16.msra.mxu0 0
        %492 = vmatprep.subr.bf16.mxu0 0
        %493 = vmatpush1.bf16.msra.mxu0 0
        %494 = vmatprep.subr.bf16.mxu0 0
        %495 = vmatpush1.bf16.msra.mxu0 0
        %496 = vmatprep.subr.bf16.mxu0 0
        %497 = vmatpush1.bf16.msra.mxu0 0
        %498 = vmatprep.subr.bf16.mxu0 0
        %499 = vmatpush1.bf16.msra.mxu0 0
        %500 = vmatprep.subr.bf16.mxu0 0
        %501 = vmatpush1.bf16.msra.mxu0 0
        %502 = vmatprep.subr.bf16.mxu0 0
        %503 = vmatpush1.bf16.msra.mxu0 0
        %504 = vmatprep.subr.bf16.mxu0 0
        %505 = vmatpush1.bf16.msra.mxu0 0
        %506 = vmatprep.mubr.bf16.mxu0 0
        %507 = vmatmul.mubr.bf16.gmra.mrb[0].mxu0 %v448
        %v508 = vpop.f32.mrb[0].mxu0
        %v509 = vadd.f32 %v385, %v508
        %v510 = vpop.f32.mrb[0].mxu0
        %v511 = vpop.f32.mrb[0].mxu0
        %v512 = vadd.f32 %v388, %v511
        %v513 = vpop.f32.mrb[0].mxu0
        %514 = vmatprep.mubr.bf16.mxu0 0
        %515 = vmatmul.mubr.bf16.gmra.mrb[0].mxu0 %v451
        %v516 = vpop.f32.mrb[0].mxu0
        %v517 = vadd.f32 %v393, %v516
        %v518 = vpop.f32.mrb[0].mxu0
        %v519 = vpop.f32.mrb[0].mxu0
        %v520 = vadd.f32 %v396, %v519
        %v521 = vpop.f32.mrb[0].mxu0
        %522 = vmatprep.mubr.bf16.mxu0 0
        %523 = vmatmul.mubr.bf16.gmra.mrb[0].mxu0 %v454
        %v524 = vpop.f32.mrb[0].mxu0
        %v525 = vadd.f32 %v401, %v524
        %v526 = vpop.f32.mrb[0].mxu0
        %v527 = vpop.f32.mrb[0].mxu0
        %v528 = vadd.f32 %v404, %v527
        %v529 = vpop.f32.mrb[0].mxu0
        %530 = vmatprep.mubr.bf16.mxu0 0
        %531 = vmatmul.mubr.bf16.gmra.mrb[0].mxu0 %v457
        %v532 = vpop.f32.mrb[0].mxu0
        %v533 = vadd.f32 %v409, %v532
        %v534 = vpop.f32.mrb[0].mxu0
        %v535 = vpop.f32.mrb[0].mxu0
        %v536 = vadd.f32 %v412, %v535
        %v537 = vpop.f32.mrb[0].mxu0
        %538 = vmatprep.mubr.bf16.mxu0 0
        %539 = vmatmul.mubr.bf16.gmra.mrb[0].mxu0 %v460
        %v540 = vpop.f32.mrb[0].mxu0
        %v541 = vadd.f32 %v417, %v540
        %v542 = vpop.f32.mrb[0].mxu0
        %v543 = vpop.f32.mrb[0].mxu0
        %v544 = vadd.f32 %v420, %v543
        %v545 = vpop.f32.mrb[0].mxu0
        %546 = vmatprep.mubr.bf16.mxu0 0
        %547 = vmatmul.mubr.bf16.gmra.mrb[0].mxu0 %v463
        %v548 = vpop.f32.mrb[0].mxu0
        %v549 = vadd.f32 %v425, %v548
        %v550 = vpop.f32.mrb[0].mxu0
        %v551 = vpop.f32.mrb[0].mxu0
        %v552 = vadd.f32 %v428, %v551
        %v553 = vpop.f32.mrb[0].mxu0
        %554 = vmatprep.mubr.bf16.mxu0 0
        %555 = vmatmul.mubr.bf16.gmra.mrb[0].mxu0 %v466
        %v556 = vpop.f32.mrb[0].mxu0
        %v557 = vadd.f32 %v433, %v556
        %v558 = vpop.f32.mrb[0].mxu0
        %v559 = vpop.f32.mrb[0].mxu0
        %v560 = vadd.f32 %v436, %v559
        %v561 = vpop.f32.mrb[0].mxu0
        %562 = vmatprep.mubr.bf16.mxu0 0
        %563 = vmatmul.mubr.bf16.gmra.mrb[0].mxu0 %v469
        %v564 = vpop.f32.mrb[0].mxu0
        %v565 = vadd.f32 %v441, %v564
        %v566 = vpop.f32.mrb[0].mxu0
        %v567 = vpop.f32.mrb[0].mxu0
        %v568 = vadd.f32 %v444, %v567
        %v569 = vpop.f32.mrb[0].mxu0
        %570 = vdwg.mxu0
        %s571 = sadd.s32 %s266, 2
        %s572 = scalar_lea.vmem %s253, %s571
        %v573 = vld [vmem:[%s572] sm:$0xff]
        %v574 = vld [vmem:[%s572 + $0x8] sm:$0xff]
        %v575 = vld [vmem:[%s572 + $0x10] sm:$0xff]
        %v576 = vld [vmem:[%s572 + $0x18] sm:$0xff]
        %v577 = vld [vmem:[%s572 + $0x20] sm:$0xff]
        %v578 = vld [vmem:[%s572 + $0x28] sm:$0xff]
        %v579 = vld [vmem:[%s572 + $0x30] sm:$0xff]
        %v580 = vld [vmem:[%s572 + $0x38] sm:$0xff]
        %v581 = vld [vmem:[%s572 + $0x40] sm:$0xff]
        %v582 = vld [vmem:[%s572 + $0x48] sm:$0xff]
        %v583 = vld [vmem:[%s572 + $0x50] sm:$0xff]
        %v584 = vld [vmem:[%s572 + $0x58] sm:$0xff]
        %v585 = vld [vmem:[%s572 + $0x60] sm:$0xff]
        %v586 = vld [vmem:[%s572 + $0x68] sm:$0xff]
        %v587 = vld [vmem:[%s572 + $0x70] sm:$0xff]
        %v588 = vld [vmem:[%s572 + $0x78] sm:$0xff]
        %v589 = vpack.c.bf16 %v574, %v573
        %v590 = vpack.c.bf16 %v576, %v575
        %v591 = vpack.c.bf16 %v578, %v577
        %v592 = vpack.c.bf16 %v580, %v579
        %v593 = vpack.c.bf16 %v582, %v581
        %v594 = vpack.c.bf16 %v584, %v583
        %v595 = vpack.c.bf16 %v586, %v585
        %v596 = vpack.c.bf16 %v588, %v587
        %s597 = scalar_lea.vmem %s257, 4
        %v598 = vld [vmem:[%s597] sm:$0x3]
        %v600 = vsel %vm321, %v589, 0
        %v603 = vsel %vm321, %v590, 0
        %v606 = vsel %vm321, %v591, 0
        %v609 = vsel %vm321, %v592, 0
        %v612 = vsel %vm321, %v593, 0
        %v615 = vsel %vm321, %v594, 0
        %v618 = vsel %vm321, %v595, 0
        %v621 = vsel %vm321, %v596, 0
        %v624 = vsel %vm346, %v598, 0
        %626 = vmatprep.subr.bf16.mxu0 0
        %627 = vmatpush1.bf16.msra.mxu0 %v624
        %628 = vmatprep.subr.bf16.mxu0 0
        %629 = vmatpush1.bf16.msra.mxu0 0
        %630 = vmatprep.subr.bf16.mxu0 0
        %631 = vmatpush1.bf16.msra.mxu0 0
        %632 = vmatprep.subr.bf16.mxu0 0
        %633 = vmatpush1.bf16.msra.mxu0 0
        %634 = vmatprep.subr.bf16.mxu0 0
        %635 = vmatpush1.bf16.msra.mxu0 0
        %636 = vmatprep.subr.bf16.mxu0 0
        %637 = vmatpush1.bf16.msra.mxu0 0
        %638 = vmatprep.subr.bf16.mxu0 0
        %639 = vmatpush1.bf16.msra.mxu0 0
        %640 = vmatprep.subr.bf16.mxu0 0
        %641 = vmatpush1.bf16.msra.mxu0 0
        %642 = vmatprep.subr.bf16.mxu0 0
        %643 = vmatpush1.bf16.msra.mxu0 0
        %644 = vmatprep.subr.bf16.mxu0 0
        %645 = vmatpush1.bf16.msra.mxu0 0
        %646 = vmatprep.subr.bf16.mxu0 0
        %647 = vmatpush1.bf16.msra.mxu0 0
        %648 = vmatprep.subr.bf16.mxu0 0
        %649 = vmatpush1.bf16.msra.mxu0 0
        %650 = vmatprep.subr.bf16.mxu0 0
        %651 = vmatpush1.bf16.msra.mxu0 0
        %652 = vmatprep.subr.bf16.mxu0 0
        %653 = vmatpush1.bf16.msra.mxu0 0
        %654 = vmatprep.subr.bf16.mxu0 0
        %655 = vmatpush1.bf16.msra.mxu0 0
        %656 = vmatprep.subr.bf16.mxu0 0
        %657 = vmatpush1.bf16.msra.mxu0 0
        %658 = vmatprep.mubr.bf16.mxu0 0
        %659 = vmatmul.mubr.bf16.gmra.mrb[0].mxu0 %v600
        %v660 = vpop.f32.mrb[0].mxu0
        %v661 = vadd.f32 0.0, %v660
        %v662 = vpop.f32.mrb[0].mxu0
        %v663 = vpop.f32.mrb[0].mxu0
        %v664 = vadd.f32 0.0, %v663
        %v665 = vpop.f32.mrb[0].mxu0
        %666 = vmatprep.mubr.bf16.mxu0 0
        %667 = vmatmul.mubr.bf16.gmra.mrb[0].mxu0 %v603
        %v668 = vpop.f32.mrb[0].mxu0
        %v669 = vadd.f32 0.0, %v668
        %v670 = vpop.f32.mrb[0].mxu0
        %v671 = vpop.f32.mrb[0].mxu0
        %v672 = vadd.f32 0.0, %v671
        %v673 = vpop.f32.mrb[0].mxu0
        %674 = vmatprep.mubr.bf16.mxu0 0
        %675 = vmatmul.mubr.bf16.gmra.mrb[0].mxu0 %v606
        %v676 = vpop.f32.mrb[0].mxu0
        %v677 = vadd.f32 0.0, %v676
        %v678 = vpop.f32.mrb[0].mxu0
        %v679 = vpop.f32.mrb[0].mxu0
        %v680 = vadd.f32 0.0, %v679
        %v681 = vpop.f32.mrb[0].mxu0
        %682 = vmatprep.mubr.bf16.mxu0 0
        %683 = vmatmul.mubr.bf16.gmra.mrb[0].mxu0 %v609
        %v684 = vpop.f32.mrb[0].mxu0
        %v685 = vadd.f32 0.0, %v684
        %v686 = vpop.f32.mrb[0].mxu0
        %v687 = vpop.f32.mrb[0].mxu0
        %v688 = vadd.f32 0.0, %v687
        %v689 = vpop.f32.mrb[0].mxu0
        %690 = vmatprep.mubr.bf16.mxu0 0
        %691 = vmatmul.mubr.bf16.gmra.mrb[0].mxu0 %v612
        %v692 = vpop.f32.mrb[0].mxu0
        %v693 = vadd.f32 0.0, %v692
        %v694 = vpop.f32.mrb[0].mxu0
        %v695 = vpop.f32.mrb[0].mxu0
        %v696 = vadd.f32 0.0, %v695
        %v697 = vpop.f32.mrb[0].mxu0
        %698 = vmatprep.mubr.bf16.mxu0 0
        %699 = vmatmul.mubr.bf16.gmra.mrb[0].mxu0 %v615
        %v700 = vpop.f32.mrb[0].mxu0
        %v701 = vadd.f32 0.0, %v700
        %v702 = vpop.f32.mrb[0].mxu0
        %v703 = vpop.f32.mrb[0].mxu0
        %v704 = vadd.f32 0.0, %v703
        %v705 = vpop.f32.mrb[0].mxu0
        %706 = vmatprep.mubr.bf16.mxu0 0
        %707 = vmatmul.mubr.bf16.gmra.mrb[0].mxu0 %v618
        %v708 = vpop.f32.mrb[0].mxu0
        %v709 = vadd.f32 0.0, %v708
        %v710 = vpop.f32.mrb[0].mxu0
        %v711 = vpop.f32.mrb[0].mxu0
        %v712 = vadd.f32 0.0, %v711
        %v713 = vpop.f32.mrb[0].mxu0
        %714 = vmatprep.mubr.bf16.mxu0 0
        %715 = vmatmul.mubr.bf16.gmra.mrb[0].mxu0 %v621
        %v716 = vpop.f32.mrb[0].mxu0
        %v717 = vadd.f32 0.0, %v716
        %v718 = vpop.f32.mrb[0].mxu0
        %v719 = vpop.f32.mrb[0].mxu0
        %v720 = vadd.f32 0.0, %v719
        %v721 = vpop.f32.mrb[0].mxu0
        %722 = vdwg.mxu0
        %v723 = vadd.f32 %v509, %v661
        %v724 = vadd.f32 %v512, %v664
        %v725 = vadd.f32 %v517, %v669
        %v726 = vadd.f32 %v520, %v672
        %v727 = vadd.f32 %v525, %v677
        %v728 = vadd.f32 %v528, %v680
        %v729 = vadd.f32 %v533, %v685
        %v730 = vadd.f32 %v536, %v688
        %v731 = vadd.f32 %v541, %v693
        %v732 = vadd.f32 %v544, %v696
        %v733 = vadd.f32 %v549, %v701
        %v734 = vadd.f32 %v552, %v704
        %v735 = vadd.f32 %v557, %v709
        %v736 = vadd.f32 %v560, %v712
        %v737 = vadd.f32 %v565, %v717
        %v738 = vadd.f32 %v568, %v720
        %s739 = sadd.s32 %s266, 18
        %s740 = scalar_lea.vmem %s253, %s739
        %v741 = vld [vmem:[%s740] sm:$0xff]
        %v742 = vld [vmem:[%s740 + $0x8] sm:$0xff]
        %v743 = vld [vmem:[%s740 + $0x10] sm:$0xff]
        %v744 = vld [vmem:[%s740 + $0x18] sm:$0xff]
        %v745 = vld [vmem:[%s740 + $0x20] sm:$0xff]
        %v746 = vld [vmem:[%s740 + $0x28] sm:$0xff]
        %v747 = vld [vmem:[%s740 + $0x30] sm:$0xff]
        %v748 = vld [vmem:[%s740 + $0x38] sm:$0xff]
        %v749 = vld [vmem:[%s740 + $0x40] sm:$0xff]
        %v750 = vld [vmem:[%s740 + $0x48] sm:$0xff]
        %v751 = vld [vmem:[%s740 + $0x50] sm:$0xff]
        %v752 = vld [vmem:[%s740 + $0x58] sm:$0xff]
        %v753 = vld [vmem:[%s740 + $0x60] sm:$0xff]
        %v754 = vld [vmem:[%s740 + $0x68] sm:$0xff]
        %v755 = vld [vmem:[%s740 + $0x70] sm:$0xff]
        %v756 = vld [vmem:[%s740 + $0x78] sm:$0xff]
        %v757 = vpack.c.bf16 %v742, %v741
        %v758 = vpack.c.bf16 %v744, %v743
        %v759 = vpack.c.bf16 %v746, %v745
        %v760 = vpack.c.bf16 %v748, %v747
        %v761 = vpack.c.bf16 %v750, %v749
        %v762 = vpack.c.bf16 %v752, %v751
        %v763 = vpack.c.bf16 %v754, %v753
        %v764 = vpack.c.bf16 %v756, %v755
        %s765 = scalar_lea.vmem %s257, 6
        %v766 = vld [vmem:[%s765] sm:$0x3]
        %v768 = vsel %vm321, %v757, 0
        %v771 = vsel %vm321, %v758, 0
        %v774 = vsel %vm321, %v759, 0
        %v777 = vsel %vm321, %v760, 0
        %v780 = vsel %vm321, %v761, 0
        %v783 = vsel %vm321, %v762, 0
        %v786 = vsel %vm321, %v763, 0
        %v789 = vsel %vm321, %v764, 0
        %v792 = vsel %vm346, %v766, 0
        %794 = vmatprep.subr.bf16.mxu0 0
        %795 = vmatpush1.bf16.msra.mxu0 %v792
        %796 = vmatprep.subr.bf16.mxu0 0
        %797 = vmatpush1.bf16.msra.mxu0 0
        %798 = vmatprep.subr.bf16.mxu0 0
        %799 = vmatpush1.bf16.msra.mxu0 0
        %800 = vmatprep.subr.bf16.mxu0 0
        %801 = vmatpush1.bf16.msra.mxu0 0
        %802 = vmatprep.subr.bf16.mxu0 0
        %803 = vmatpush1.bf16.msra.mxu0 0
        %804 = vmatprep.subr.bf16.mxu0 0
        %805 = vmatpush1.bf16.msra.mxu0 0
        %806 = vmatprep.subr.bf16.mxu0 0
        %807 = vmatpush1.bf16.msra.mxu0 0
        %808 = vmatprep.subr.bf16.mxu0 0
        %809 = vmatpush1.bf16.msra.mxu0 0
        %810 = vmatprep.subr.bf16.mxu0 0
        %811 = vmatpush1.bf16.msra.mxu0 0
        %812 = vmatprep.subr.bf16.mxu0 0
        %813 = vmatpush1.bf16.msra.mxu0 0
        %814 = vmatprep.subr.bf16.mxu0 0
        %815 = vmatpush1.bf16.msra.mxu0 0
        %816 = vmatprep.subr.bf16.mxu0 0
        %817 = vmatpush1.bf16.msra.mxu0 0
        %818 = vmatprep.subr.bf16.mxu0 0
        %819 = vmatpush1.bf16.msra.mxu0 0
        %820 = vmatprep.subr.bf16.mxu0 0
        %821 = vmatpush1.bf16.msra.mxu0 0
        %822 = vmatprep.subr.bf16.mxu0 0
        %823 = vmatpush1.bf16.msra.mxu0 0
        %824 = vmatprep.subr.bf16.mxu0 0
        %825 = vmatpush1.bf16.msra.mxu0 0
        %826 = vmatprep.mubr.bf16.mxu0 0
        %827 = vmatmul.mubr.bf16.gmra.mrb[0].mxu0 %v768
        %v828 = vpop.f32.mrb[0].mxu0
        %v829 = vadd.f32 0.0, %v828
        %v830 = vpop.f32.mrb[0].mxu0
        %v831 = vpop.f32.mrb[0].mxu0
        %v832 = vadd.f32 0.0, %v831
        %v833 = vpop.f32.mrb[0].mxu0
        %834 = vmatprep.mubr.bf16.mxu0 0
        %835 = vmatmul.mubr.bf16.gmra.mrb[0].mxu0 %v771
        %v836 = vpop.f32.mrb[0].mxu0
        %v837 = vadd.f32 0.0, %v836
        %v838 = vpop.f32.mrb[0].mxu0
        %v839 = vpop.f32.mrb[0].mxu0
        %v840 = vadd.f32 0.0, %v839
        %v841 = vpop.f32.mrb[0].mxu0
        %842 = vmatprep.mubr.bf16.mxu0 0
        %843 = vmatmul.mubr.bf16.gmra.mrb[0].mxu0 %v774
        %v844 = vpop.f32.mrb[0].mxu0
        %v845 = vadd.f32 0.0, %v844
        %v846 = vpop.f32.mrb[0].mxu0
        %v847 = vpop.f32.mrb[0].mxu0
        %v848 = vadd.f32 0.0, %v847
        %v849 = vpop.f32.mrb[0].mxu0
        %850 = vmatprep.mubr.bf16.mxu0 0
        %851 = vmatmul.mubr.bf16.gmra.mrb[0].mxu0 %v777
        %v852 = vpop.f32.mrb[0].mxu0
        %v853 = vadd.f32 0.0, %v852
        %v854 = vpop.f32.mrb[0].mxu0
        %v855 = vpop.f32.mrb[0].mxu0
        %v856 = vadd.f32 0.0, %v855
        %v857 = vpop.f32.mrb[0].mxu0
        %858 = vmatprep.mubr.bf16.mxu0 0
        %859 = vmatmul.mubr.bf16.gmra.mrb[0].mxu0 %v780
        %v860 = vpop.f32.mrb[0].mxu0
        %v861 = vadd.f32 0.0, %v860
        %v862 = vpop.f32.mrb[0].mxu0
        %v863 = vpop.f32.mrb[0].mxu0
        %v864 = vadd.f32 0.0, %v863
        %v865 = vpop.f32.mrb[0].mxu0
        %866 = vmatprep.mubr.bf16.mxu0 0
        %867 = vmatmul.mubr.bf16.gmra.mrb[0].mxu0 %v783
        %v868 = vpop.f32.mrb[0].mxu0
        %v869 = vadd.f32 0.0, %v868
        %v870 = vpop.f32.mrb[0].mxu0
        %v871 = vpop.f32.mrb[0].mxu0
        %v872 = vadd.f32 0.0, %v871
        %v873 = vpop.f32.mrb[0].mxu0
        %874 = vmatprep.mubr.bf16.mxu0 0
        %875 = vmatmul.mubr.bf16.gmra.mrb[0].mxu0 %v786
        %v876 = vpop.f32.mrb[0].mxu0
        %v877 = vadd.f32 0.0, %v876
        %v878 = vpop.f32.mrb[0].mxu0
        %v879 = vpop.f32.mrb[0].mxu0
        %v880 = vadd.f32 0.0, %v879
        %v881 = vpop.f32.mrb[0].mxu0
        %882 = vmatprep.mubr.bf16.mxu0 0
        %883 = vmatmul.mubr.bf16.gmra.mrb[0].mxu0 %v789
        %v884 = vpop.f32.mrb[0].mxu0
        %v885 = vadd.f32 0.0, %v884
        %v886 = vpop.f32.mrb[0].mxu0
        %v887 = vpop.f32.mrb[0].mxu0
        %v888 = vadd.f32 0.0, %v887
        %v889 = vpop.f32.mrb[0].mxu0
        %890 = vdwg.mxu0
        %v891 = vadd.f32 %v723, %v829
        %v892 = vadd.f32 %v724, %v832
        %v893 = vadd.f32 %v725, %v837
        %v894 = vadd.f32 %v726, %v840
        %v895 = vadd.f32 %v727, %v845
        %v896 = vadd.f32 %v728, %v848
        %v897 = vadd.f32 %v729, %v853
        %v898 = vadd.f32 %v730, %v856
        %v899 = vadd.f32 %v731, %v861
        %v900 = vadd.f32 %v732, %v864
        %v901 = vadd.f32 %v733, %v869
        %v902 = vadd.f32 %v734, %v872
        %v903 = vadd.f32 %v735, %v877
        %v904 = vadd.f32 %v736, %v880
        %v905 = vadd.f32 %v737, %v885
        %v906 = vadd.f32 %v738, %v888
        %s907 = sadd.s32 %s266, 19
        %s908 = scalar_lea.vmem %s253, %s907
        %v909 = vld [vmem:[%s908] sm:$0xff]
        %v910 = vld [vmem:[%s908 + $0x8] sm:$0xff]
        %v911 = vld [vmem:[%s908 + $0x10] sm:$0xff]
        %v912 = vld [vmem:[%s908 + $0x18] sm:$0xff]
        %v913 = vld [vmem:[%s908 + $0x20] sm:$0xff]
        %v914 = vld [vmem:[%s908 + $0x28] sm:$0xff]
        %v915 = vld [vmem:[%s908 + $0x30] sm:$0xff]
        %v916 = vld [vmem:[%s908 + $0x38] sm:$0xff]
        %v917 = vld [vmem:[%s908 + $0x40] sm:$0xff]
        %v918 = vld [vmem:[%s908 + $0x48] sm:$0xff]
        %v919 = vld [vmem:[%s908 + $0x50] sm:$0xff]
        %v920 = vld [vmem:[%s908 + $0x58] sm:$0xff]
        %v921 = vld [vmem:[%s908 + $0x60] sm:$0xff]
        %v922 = vld [vmem:[%s908 + $0x68] sm:$0xff]
        %v923 = vld [vmem:[%s908 + $0x70] sm:$0xff]
        %v924 = vld [vmem:[%s908 + $0x78] sm:$0xff]
        %v925 = vpack.c.bf16 %v910, %v909
        %v926 = vpack.c.bf16 %v912, %v911
        %v927 = vpack.c.bf16 %v914, %v913
        %v928 = vpack.c.bf16 %v916, %v915
        %v929 = vpack.c.bf16 %v918, %v917
        %v930 = vpack.c.bf16 %v920, %v919
        %v931 = vpack.c.bf16 %v922, %v921
        %v932 = vpack.c.bf16 %v924, %v923
        %s933 = scalar_lea.vmem %s257, 8
        %v934 = vld [vmem:[%s933] sm:$0x3]
        %v936 = vsel %vm321, %v925, 0
        %v939 = vsel %vm321, %v926, 0
        %v942 = vsel %vm321, %v927, 0
        %v945 = vsel %vm321, %v928, 0
        %v948 = vsel %vm321, %v929, 0
        %v951 = vsel %vm321, %v930, 0
        %v954 = vsel %vm321, %v931, 0
        %v957 = vsel %vm321, %v932, 0
        %v960 = vsel %vm346, %v934, 0
        %962 = vmatprep.subr.bf16.mxu0 0
        %963 = vmatpush1.bf16.msra.mxu0 %v960
        %964 = vmatprep.subr.bf16.mxu0 0
        %965 = vmatpush1.bf16.msra.mxu0 0
        %966 = vmatprep.subr.bf16.mxu0 0
        %967 = vmatpush1.bf16.msra.mxu0 0
        %968 = vmatprep.subr.bf16.mxu0 0
        %969 = vmatpush1.bf16.msra.mxu0 0
        %970 = vmatprep.subr.bf16.mxu0 0
        %971 = vmatpush1.bf16.msra.mxu0 0
        %972 = vmatprep.subr.bf16.mxu0 0
        %973 = vmatpush1.bf16.msra.mxu0 0
        %974 = vmatprep.subr.bf16.mxu0 0
        %975 = vmatpush1.bf16.msra.mxu0 0
        %976 = vmatprep.subr.bf16.mxu0 0
        %977 = vmatpush1.bf16.msra.mxu0 0
        %978 = vmatprep.subr.bf16.mxu0 0
        %979 = vmatpush1.bf16.msra.mxu0 0
        %980 = vmatprep.subr.bf16.mxu0 0
        %981 = vmatpush1.bf16.msra.mxu0 0
        %982 = vmatprep.subr.bf16.mxu0 0
        %983 = vmatpush1.bf16.msra.mxu0 0
        %984 = vmatprep.subr.bf16.mxu0 0
        %985 = vmatpush1.bf16.msra.mxu0 0
        %986 = vmatprep.subr.bf16.mxu0 0
        %987 = vmatpush1.bf16.msra.mxu0 0
        %988 = vmatprep.subr.bf16.mxu0 0
        %989 = vmatpush1.bf16.msra.mxu0 0
        %990 = vmatprep.subr.bf16.mxu0 0
        %991 = vmatpush1.bf16.msra.mxu0 0
        %992 = vmatprep.subr.bf16.mxu0 0
        %993 = vmatpush1.bf16.msra.mxu0 0
        %994 = vmatprep.mubr.bf16.mxu0 0
        %995 = vmatmul.mubr.bf16.gmra.mrb[0].mxu0 %v936
        %v996 = vpop.f32.mrb[0].mxu0
        %v997 = vadd.f32 0.0, %v996
        %v998 = vpop.f32.mrb[0].mxu0
        %v999 = vpop.f32.mrb[0].mxu0
        %v1000 = vadd.f32 0.0, %v999
        %v1001 = vpop.f32.mrb[0].mxu0
        %1002 = vmatprep.mubr.bf16.mxu0 0
        %1003 = vmatmul.mubr.bf16.gmra.mrb[0].mxu0 %v939
        %v1004 = vpop.f32.mrb[0].mxu0
        %v1005 = vadd.f32 0.0, %v1004
        %v1006 = vpop.f32.mrb[0].mxu0
        %v1007 = vpop.f32.mrb[0].mxu0
        %v1008 = vadd.f32 0.0, %v1007
        %v1009 = vpop.f32.mrb[0].mxu0
        %1010 = vmatprep.mubr.bf16.mxu0 0
        %1011 = vmatmul.mubr.bf16.gmra.mrb[0].mxu0 %v942
        %v1012 = vpop.f32.mrb[0].mxu0
        %v1013 = vadd.f32 0.0, %v1012
        %v1014 = vpop.f32.mrb[0].mxu0
        %v1015 = vpop.f32.mrb[0].mxu0
        %v1016 = vadd.f32 0.0, %v1015
        %v1017 = vpop.f32.mrb[0].mxu0
        %1018 = vmatprep.mubr.bf16.mxu0 0
        %1019 = vmatmul.mubr.bf16.gmra.mrb[0].mxu0 %v945
        %v1020 = vpop.f32.mrb[0].mxu0
        %v1021 = vadd.f32 0.0, %v1020
        %v1022 = vpop.f32.mrb[0].mxu0
        %v1023 = vpop.f32.mrb[0].mxu0
        %v1024 = vadd.f32 0.0, %v1023
        %v1025 = vpop.f32.mrb[0].mxu0
        %1026 = vmatprep.mubr.bf16.mxu0 0
        %1027 = vmatmul.mubr.bf16.gmra.mrb[0].mxu0 %v948
        %v1028 = vpop.f32.mrb[0].mxu0
        %v1029 = vadd.f32 0.0, %v1028
        %v1030 = vpop.f32.mrb[0].mxu0
        %v1031 = vpop.f32.mrb[0].mxu0
        %v1032 = vadd.f32 0.0, %v1031
        %v1033 = vpop.f32.mrb[0].mxu0
        %1034 = vmatprep.mubr.bf16.mxu0 0
        %1035 = vmatmul.mubr.bf16.gmra.mrb[0].mxu0 %v951
        %v1036 = vpop.f32.mrb[0].mxu0
        %v1037 = vadd.f32 0.0, %v1036
        %v1038 = vpop.f32.mrb[0].mxu0
        %v1039 = vpop.f32.mrb[0].mxu0
        %v1040 = vadd.f32 0.0, %v1039
        %v1041 = vpop.f32.mrb[0].mxu0
        %1042 = vmatprep.mubr.bf16.mxu0 0
        %1043 = vmatmul.mubr.bf16.gmra.mrb[0].mxu0 %v954
        %v1044 = vpop.f32.mrb[0].mxu0
        %v1045 = vadd.f32 0.0, %v1044
        %v1046 = vpop.f32.mrb[0].mxu0
        %v1047 = vpop.f32.mrb[0].mxu0
        %v1048 = vadd.f32 0.0, %v1047
        %v1049 = vpop.f32.mrb[0].mxu0
        %1050 = vmatprep.mubr.bf16.mxu0 0
        %1051 = vmatmul.mubr.bf16.gmra.mrb[0].mxu0 %v957
        %v1052 = vpop.f32.mrb[0].mxu0
        %v1053 = vadd.f32 0.0, %v1052
        %v1054 = vpop.f32.mrb[0].mxu0
        %v1055 = vpop.f32.mrb[0].mxu0
        %v1056 = vadd.f32 0.0, %v1055
        %v1057 = vpop.f32.mrb[0].mxu0
        %1058 = vdwg.mxu0
        %v1059 = vadd.f32 %v891, %v997
        %v1060 = vadd.f32 %v892, %v1000
        %v1061 = vadd.f32 %v893, %v1005
        %v1062 = vadd.f32 %v894, %v1008
        %v1063 = vadd.f32 %v895, %v1013
        %v1064 = vadd.f32 %v896, %v1016
        %v1065 = vadd.f32 %v897, %v1021
        %v1066 = vadd.f32 %v898, %v1024
        %v1067 = vadd.f32 %v899, %v1029
        %v1068 = vadd.f32 %v900, %v1032
        %v1069 = vadd.f32 %v901, %v1037
        %v1070 = vadd.f32 %v902, %v1040
        %v1071 = vadd.f32 %v903, %v1045
        %v1072 = vadd.f32 %v904, %v1048
        %v1073 = vadd.f32 %v905, %v1053
        %v1074 = vadd.f32 %v906, %v1056
        %s1075 = sadd.s32 %s266, 20
        %s1076 = scalar_lea.vmem %s253, %s1075
        %v1077 = vld [vmem:[%s1076] sm:$0xff]
        %v1078 = vld [vmem:[%s1076 + $0x8] sm:$0xff]
        %v1079 = vld [vmem:[%s1076 + $0x10] sm:$0xff]
        %v1080 = vld [vmem:[%s1076 + $0x18] sm:$0xff]
        %v1081 = vld [vmem:[%s1076 + $0x20] sm:$0xff]
        %v1082 = vld [vmem:[%s1076 + $0x28] sm:$0xff]
        %v1083 = vld [vmem:[%s1076 + $0x30] sm:$0xff]
        %v1084 = vld [vmem:[%s1076 + $0x38] sm:$0xff]
        %v1085 = vld [vmem:[%s1076 + $0x40] sm:$0xff]
        %v1086 = vld [vmem:[%s1076 + $0x48] sm:$0xff]
        %v1087 = vld [vmem:[%s1076 + $0x50] sm:$0xff]
        %v1088 = vld [vmem:[%s1076 + $0x58] sm:$0xff]
        %v1089 = vld [vmem:[%s1076 + $0x60] sm:$0xff]
        %v1090 = vld [vmem:[%s1076 + $0x68] sm:$0xff]
        %v1091 = vld [vmem:[%s1076 + $0x70] sm:$0xff]
        %v1092 = vld [vmem:[%s1076 + $0x78] sm:$0xff]
        %v1093 = vpack.c.bf16 %v1078, %v1077
        %v1094 = vpack.c.bf16 %v1080, %v1079
        %v1095 = vpack.c.bf16 %v1082, %v1081
        %v1096 = vpack.c.bf16 %v1084, %v1083
        %v1097 = vpack.c.bf16 %v1086, %v1085
        %v1098 = vpack.c.bf16 %v1088, %v1087
        %v1099 = vpack.c.bf16 %v1090, %v1089
        %v1100 = vpack.c.bf16 %v1092, %v1091
        %s1101 = scalar_lea.vmem %s257, 10
        %v1102 = vld [vmem:[%s1101] sm:$0x3]
        %v1104 = vsel %vm321, %v1093, 0
        %v1107 = vsel %vm321, %v1094, 0
        %v1110 = vsel %vm321, %v1095, 0
        %v1113 = vsel %vm321, %v1096, 0
        %v1116 = vsel %vm321, %v1097, 0
        %v1119 = vsel %vm321, %v1098, 0
        %v1122 = vsel %vm321, %v1099, 0
        %v1125 = vsel %vm321, %v1100, 0
        %v1128 = vsel %vm346, %v1102, 0
        %1130 = vmatprep.subr.bf16.mxu0 0
        %1131 = vmatpush1.bf16.msra.mxu0 %v1128
        %1132 = vmatprep.subr.bf16.mxu0 0
        %1133 = vmatpush1.bf16.msra.mxu0 0
        %1134 = vmatprep.subr.bf16.mxu0 0
        %1135 = vmatpush1.bf16.msra.mxu0 0
        %1136 = vmatprep.subr.bf16.mxu0 0
        %1137 = vmatpush1.bf16.msra.mxu0 0
        %1138 = vmatprep.subr.bf16.mxu0 0
        %1139 = vmatpush1.bf16.msra.mxu0 0
        %1140 = vmatprep.subr.bf16.mxu0 0
        %1141 = vmatpush1.bf16.msra.mxu0 0
        %1142 = vmatprep.subr.bf16.mxu0 0
        %1143 = vmatpush1.bf16.msra.mxu0 0
        %1144 = vmatprep.subr.bf16.mxu0 0
        %1145 = vmatpush1.bf16.msra.mxu0 0
        %1146 = vmatprep.subr.bf16.mxu0 0
        %1147 = vmatpush1.bf16.msra.mxu0 0
        %1148 = vmatprep.subr.bf16.mxu0 0
        %1149 = vmatpush1.bf16.msra.mxu0 0
        %1150 = vmatprep.subr.bf16.mxu0 0
        %1151 = vmatpush1.bf16.msra.mxu0 0
        %1152 = vmatprep.subr.bf16.mxu0 0
        %1153 = vmatpush1.bf16.msra.mxu0 0
        %1154 = vmatprep.subr.bf16.mxu0 0
        %1155 = vmatpush1.bf16.msra.mxu0 0
        %1156 = vmatprep.subr.bf16.mxu0 0
        %1157 = vmatpush1.bf16.msra.mxu0 0
        %1158 = vmatprep.subr.bf16.mxu0 0
        %1159 = vmatpush1.bf16.msra.mxu0 0
        %1160 = vmatprep.subr.bf16.mxu0 0
        %1161 = vmatpush1.bf16.msra.mxu0 0
        %1162 = vmatprep.mubr.bf16.mxu0 0
        %1163 = vmatmul.mubr.bf16.gmra.mrb[0].mxu0 %v1104
        %v1164 = vpop.f32.mrb[0].mxu0
        %v1165 = vadd.f32 0.0, %v1164
        %v1166 = vpop.f32.mrb[0].mxu0
        %v1167 = vpop.f32.mrb[0].mxu0
        %v1168 = vadd.f32 0.0, %v1167
        %v1169 = vpop.f32.mrb[0].mxu0
        %1170 = vmatprep.mubr.bf16.mxu0 0
        %1171 = vmatmul.mubr.bf16.gmra.mrb[0].mxu0 %v1107
        %v1172 = vpop.f32.mrb[0].mxu0
        %v1173 = vadd.f32 0.0, %v1172
        %v1174 = vpop.f32.mrb[0].mxu0
        %v1175 = vpop.f32.mrb[0].mxu0
        %v1176 = vadd.f32 0.0, %v1175
        %v1177 = vpop.f32.mrb[0].mxu0
        %1178 = vmatprep.mubr.bf16.mxu0 0
        %1179 = vmatmul.mubr.bf16.gmra.mrb[0].mxu0 %v1110
        %v1180 = vpop.f32.mrb[0].mxu0
        %v1181 = vadd.f32 0.0, %v1180
        %v1182 = vpop.f32.mrb[0].mxu0
        %v1183 = vpop.f32.mrb[0].mxu0
        %v1184 = vadd.f32 0.0, %v1183
        %v1185 = vpop.f32.mrb[0].mxu0
        %1186 = vmatprep.mubr.bf16.mxu0 0
        %1187 = vmatmul.mubr.bf16.gmra.mrb[0].mxu0 %v1113
        %v1188 = vpop.f32.mrb[0].mxu0
        %v1189 = vadd.f32 0.0, %v1188
        %v1190 = vpop.f32.mrb[0].mxu0
        %v1191 = vpop.f32.mrb[0].mxu0
        %v1192 = vadd.f32 0.0, %v1191
        %v1193 = vpop.f32.mrb[0].mxu0
        %1194 = vmatprep.mubr.bf16.mxu0 0
        %1195 = vmatmul.mubr.bf16.gmra.mrb[0].mxu0 %v1116
        %v1196 = vpop.f32.mrb[0].mxu0
        %v1197 = vadd.f32 0.0, %v1196
        %v1198 = vpop.f32.mrb[0].mxu0
        %v1199 = vpop.f32.mrb[0].mxu0
        %v1200 = vadd.f32 0.0, %v1199
        %v1201 = vpop.f32.mrb[0].mxu0
        %1202 = vmatprep.mubr.bf16.mxu0 0
        %1203 = vmatmul.mubr.bf16.gmra.mrb[0].mxu0 %v1119
        %v1204 = vpop.f32.mrb[0].mxu0
        %v1205 = vadd.f32 0.0, %v1204
        %v1206 = vpop.f32.mrb[0].mxu0
        %v1207 = vpop.f32.mrb[0].mxu0
        %v1208 = vadd.f32 0.0, %v1207
        %v1209 = vpop.f32.mrb[0].mxu0
        %1210 = vmatprep.mubr.bf16.mxu0 0
        %1211 = vmatmul.mubr.bf16.gmra.mrb[0].mxu0 %v1122
        %v1212 = vpop.f32.mrb[0].mxu0
        %v1213 = vadd.f32 0.0, %v1212
        %v1214 = vpop.f32.mrb[0].mxu0
        %v1215 = vpop.f32.mrb[0].mxu0
        %v1216 = vadd.f32 0.0, %v1215
        %v1217 = vpop.f32.mrb[0].mxu0
        %1218 = vmatprep.mubr.bf16.mxu0 0
        %1219 = vmatmul.mubr.bf16.gmra.mrb[0].mxu0 %v1125
        %v1220 = vpop.f32.mrb[0].mxu0
        %v1221 = vadd.f32 0.0, %v1220
        %v1222 = vpop.f32.mrb[0].mxu0
        %v1223 = vpop.f32.mrb[0].mxu0
        %v1224 = vadd.f32 0.0, %v1223
        %v1225 = vpop.f32.mrb[0].mxu0
        %1226 = vdwg.mxu0
        %v1227 = vadd.f32 %v1059, %v1165
        %v1228 = vadd.f32 %v1060, %v1168
        %v1229 = vadd.f32 %v1061, %v1173
        %v1230 = vadd.f32 %v1062, %v1176
        %v1231 = vadd.f32 %v1063, %v1181
        %v1232 = vadd.f32 %v1064, %v1184
        %v1233 = vadd.f32 %v1065, %v1189
        %v1234 = vadd.f32 %v1066, %v1192
        %v1235 = vadd.f32 %v1067, %v1197
        %v1236 = vadd.f32 %v1068, %v1200
        %v1237 = vadd.f32 %v1069, %v1205
        %v1238 = vadd.f32 %v1070, %v1208
        %v1239 = vadd.f32 %v1071, %v1213
        %v1240 = vadd.f32 %v1072, %v1216
        %v1241 = vadd.f32 %v1073, %v1221
        %v1242 = vadd.f32 %v1074, %v1224
        %s1243 = sadd.s32 %s266, 36
        %s1244 = scalar_lea.vmem %s253, %s1243
        %v1245 = vld [vmem:[%s1244] sm:$0xff]
        %v1246 = vld [vmem:[%s1244 + $0x8] sm:$0xff]
        %v1247 = vld [vmem:[%s1244 + $0x10] sm:$0xff]
        %v1248 = vld [vmem:[%s1244 + $0x18] sm:$0xff]
        %v1249 = vld [vmem:[%s1244 + $0x20] sm:$0xff]
        %v1250 = vld [vmem:[%s1244 + $0x28] sm:$0xff]
        %v1251 = vld [vmem:[%s1244 + $0x30] sm:$0xff]
        %v1252 = vld [vmem:[%s1244 + $0x38] sm:$0xff]
        %v1253 = vld [vmem:[%s1244 + $0x40] sm:$0xff]
        %v1254 = vld [vmem:[%s1244 + $0x48] sm:$0xff]
        %v1255 = vld [vmem:[%s1244 + $0x50] sm:$0xff]
        %v1256 = vld [vmem:[%s1244 + $0x58] sm:$0xff]
        %v1257 = vld [vmem:[%s1244 + $0x60] sm:$0xff]
        %v1258 = vld [vmem:[%s1244 + $0x68] sm:$0xff]
        %v1259 = vld [vmem:[%s1244 + $0x70] sm:$0xff]
        %v1260 = vld [vmem:[%s1244 + $0x78] sm:$0xff]
        %v1261 = vpack.c.bf16 %v1246, %v1245
        %v1262 = vpack.c.bf16 %v1248, %v1247
        %v1263 = vpack.c.bf16 %v1250, %v1249
        %v1264 = vpack.c.bf16 %v1252, %v1251
        %v1265 = vpack.c.bf16 %v1254, %v1253
        %v1266 = vpack.c.bf16 %v1256, %v1255
        %v1267 = vpack.c.bf16 %v1258, %v1257
        %v1268 = vpack.c.bf16 %v1260, %v1259
        %s1269 = scalar_lea.vmem %s257, 12
        %v1270 = vld [vmem:[%s1269] sm:$0x3]
        %v1272 = vsel %vm321, %v1261, 0
        %v1275 = vsel %vm321, %v1262, 0
        %v1278 = vsel %vm321, %v1263, 0
        %v1281 = vsel %vm321, %v1264, 0
        %v1284 = vsel %vm321, %v1265, 0
        %v1287 = vsel %vm321, %v1266, 0
        %v1290 = vsel %vm321, %v1267, 0
        %v1293 = vsel %vm321, %v1268, 0
        %v1296 = vsel %vm346, %v1270, 0
        %1298 = vmatprep.subr.bf16.mxu0 0
        %1299 = vmatpush1.bf16.msra.mxu0 %v1296
        %1300 = vmatprep.subr.bf16.mxu0 0
        %1301 = vmatpush1.bf16.msra.mxu0 0
        %1302 = vmatprep.subr.bf16.mxu0 0
        %1303 = vmatpush1.bf16.msra.mxu0 0
        %1304 = vmatprep.subr.bf16.mxu0 0
        %1305 = vmatpush1.bf16.msra.mxu0 0
        %1306 = vmatprep.subr.bf16.mxu0 0
        %1307 = vmatpush1.bf16.msra.mxu0 0
        %1308 = vmatprep.subr.bf16.mxu0 0
        %1309 = vmatpush1.bf16.msra.mxu0 0
        %1310 = vmatprep.subr.bf16.mxu0 0
        %1311 = vmatpush1.bf16.msra.mxu0 0
        %1312 = vmatprep.subr.bf16.mxu0 0
        %1313 = vmatpush1.bf16.msra.mxu0 0
        %1314 = vmatprep.subr.bf16.mxu0 0
        %1315 = vmatpush1.bf16.msra.mxu0 0
        %1316 = vmatprep.subr.bf16.mxu0 0
        %1317 = vmatpush1.bf16.msra.mxu0 0
        %1318 = vmatprep.subr.bf16.mxu0 0
        %1319 = vmatpush1.bf16.msra.mxu0 0
        %1320 = vmatprep.subr.bf16.mxu0 0
        %1321 = vmatpush1.bf16.msra.mxu0 0
        %1322 = vmatprep.subr.bf16.mxu0 0
        %1323 = vmatpush1.bf16.msra.mxu0 0
        %1324 = vmatprep.subr.bf16.mxu0 0
        %1325 = vmatpush1.bf16.msra.mxu0 0
        %1326 = vmatprep.subr.bf16.mxu0 0
        %1327 = vmatpush1.bf16.msra.mxu0 0
        %1328 = vmatprep.subr.bf16.mxu0 0
        %1329 = vmatpush1.bf16.msra.mxu0 0
        %1330 = vmatprep.mubr.bf16.mxu0 0
        %1331 = vmatmul.mubr.bf16.gmra.mrb[0].mxu0 %v1272
        %v1332 = vpop.f32.mrb[0].mxu0
        %v1333 = vadd.f32 0.0, %v1332
        %v1334 = vpop.f32.mrb[0].mxu0
        %v1335 = vpop.f32.mrb[0].mxu0
        %v1336 = vadd.f32 0.0, %v1335
        %v1337 = vpop.f32.mrb[0].mxu0
        %1338 = vmatprep.mubr.bf16.mxu0 0
        %1339 = vmatmul.mubr.bf16.gmra.mrb[0].mxu0 %v1275
        %v1340 = vpop.f32.mrb[0].mxu0
        %v1341 = vadd.f32 0.0, %v1340
        %v1342 = vpop.f32.mrb[0].mxu0
        %v1343 = vpop.f32.mrb[0].mxu0
        %v1344 = vadd.f32 0.0, %v1343
        %v1345 = vpop.f32.mrb[0].mxu0
        %1346 = vmatprep.mubr.bf16.mxu0 0
        %1347 = vmatmul.mubr.bf16.gmra.mrb[0].mxu0 %v1278
        %v1348 = vpop.f32.mrb[0].mxu0
        %v1349 = vadd.f32 0.0, %v1348
        %v1350 = vpop.f32.mrb[0].mxu0
        %v1351 = vpop.f32.mrb[0].mxu0
        %v1352 = vadd.f32 0.0, %v1351
        %v1353 = vpop.f32.mrb[0].mxu0
        %1354 = vmatprep.mubr.bf16.mxu0 0
        %1355 = vmatmul.mubr.bf16.gmra.mrb[0].mxu0 %v1281
        %v1356 = vpop.f32.mrb[0].mxu0
        %v1357 = vadd.f32 0.0, %v1356
        %v1358 = vpop.f32.mrb[0].mxu0
        %v1359 = vpop.f32.mrb[0].mxu0
        %v1360 = vadd.f32 0.0, %v1359
        %v1361 = vpop.f32.mrb[0].mxu0
        %1362 = vmatprep.mubr.bf16.mxu0 0
        %1363 = vmatmul.mubr.bf16.gmra.mrb[0].mxu0 %v1284
        %v1364 = vpop.f32.mrb[0].mxu0
        %v1365 = vadd.f32 0.0, %v1364
        %v1366 = vpop.f32.mrb[0].mxu0
        %v1367 = vpop.f32.mrb[0].mxu0
        %v1368 = vadd.f32 0.0, %v1367
        %v1369 = vpop.f32.mrb[0].mxu0
        %1370 = vmatprep.mubr.bf16.mxu0 0
        %1371 = vmatmul.mubr.bf16.gmra.mrb[0].mxu0 %v1287
        %v1372 = vpop.f32.mrb[0].mxu0
        %v1373 = vadd.f32 0.0, %v1372
        %v1374 = vpop.f32.mrb[0].mxu0
        %v1375 = vpop.f32.mrb[0].mxu0
        %v1376 = vadd.f32 0.0, %v1375
        %v1377 = vpop.f32.mrb[0].mxu0
        %1378 = vmatprep.mubr.bf16.mxu0 0
        %1379 = vmatmul.mubr.bf16.gmra.mrb[0].mxu0 %v1290
        %v1380 = vpop.f32.mrb[0].mxu0
        %v1381 = vadd.f32 0.0, %v1380
        %v1382 = vpop.f32.mrb[0].mxu0
        %v1383 = vpop.f32.mrb[0].mxu0
        %v1384 = vadd.f32 0.0, %v1383
        %v1385 = vpop.f32.mrb[0].mxu0
        %1386 = vmatprep.mubr.bf16.mxu0 0
        %1387 = vmatmul.mubr.bf16.gmra.mrb[0].mxu0 %v1293
        %v1388 = vpop.f32.mrb[0].mxu0
        %v1389 = vadd.f32 0.0, %v1388
        %v1390 = vpop.f32.mrb[0].mxu0
        %v1391 = vpop.f32.mrb[0].mxu0
        %v1392 = vadd.f32 0.0, %v1391
        %v1393 = vpop.f32.mrb[0].mxu0
        %1394 = vdwg.mxu0
        %v1395 = vadd.f32 %v1227, %v1333
        %v1396 = vadd.f32 %v1228, %v1336
        %v1397 = vadd.f32 %v1229, %v1341
        %v1398 = vadd.f32 %v1230, %v1344
        %v1399 = vadd.f32 %v1231, %v1349
        %v1400 = vadd.f32 %v1232, %v1352
        %v1401 = vadd.f32 %v1233, %v1357
        %v1402 = vadd.f32 %v1234, %v1360
        %v1403 = vadd.f32 %v1235, %v1365
        %v1404 = vadd.f32 %v1236, %v1368
        %v1405 = vadd.f32 %v1237, %v1373
        %v1406 = vadd.f32 %v1238, %v1376
        %v1407 = vadd.f32 %v1239, %v1381
        %v1408 = vadd.f32 %v1240, %v1384
        %v1409 = vadd.f32 %v1241, %v1389
        %v1410 = vadd.f32 %v1242, %v1392
        %s1411 = sadd.s32 %s266, 37
        %s1412 = scalar_lea.vmem %s253, %s1411
        %v1413 = vld [vmem:[%s1412] sm:$0xff]
        %v1414 = vld [vmem:[%s1412 + $0x8] sm:$0xff]
        %v1415 = vld [vmem:[%s1412 + $0x10] sm:$0xff]
        %v1416 = vld [vmem:[%s1412 + $0x18] sm:$0xff]
        %v1417 = vld [vmem:[%s1412 + $0x20] sm:$0xff]
        %v1418 = vld [vmem:[%s1412 + $0x28] sm:$0xff]
        %v1419 = vld [vmem:[%s1412 + $0x30] sm:$0xff]
        %v1420 = vld [vmem:[%s1412 + $0x38] sm:$0xff]
        %v1421 = vld [vmem:[%s1412 + $0x40] sm:$0xff]
        %v1422 = vld [vmem:[%s1412 + $0x48] sm:$0xff]
        %v1423 = vld [vmem:[%s1412 + $0x50] sm:$0xff]
        %v1424 = vld [vmem:[%s1412 + $0x58] sm:$0xff]
        %v1425 = vld [vmem:[%s1412 + $0x60] sm:$0xff]
        %v1426 = vld [vmem:[%s1412 + $0x68] sm:$0xff]
        %v1427 = vld [vmem:[%s1412 + $0x70] sm:$0xff]
        %v1428 = vld [vmem:[%s1412 + $0x78] sm:$0xff]
        %v1429 = vpack.c.bf16 %v1414, %v1413
        %v1430 = vpack.c.bf16 %v1416, %v1415
        %v1431 = vpack.c.bf16 %v1418, %v1417
        %v1432 = vpack.c.bf16 %v1420, %v1419
        %v1433 = vpack.c.bf16 %v1422, %v1421
        %v1434 = vpack.c.bf16 %v1424, %v1423
        %v1435 = vpack.c.bf16 %v1426, %v1425
        %v1436 = vpack.c.bf16 %v1428, %v1427
        %s1437 = scalar_lea.vmem %s257, 14
        %v1438 = vld [vmem:[%s1437] sm:$0x3]
        %v1440 = vsel %vm321, %v1429, 0
        %v1443 = vsel %vm321, %v1430, 0
        %v1446 = vsel %vm321, %v1431, 0
        %v1449 = vsel %vm321, %v1432, 0
        %v1452 = vsel %vm321, %v1433, 0
        %v1455 = vsel %vm321, %v1434, 0
        %v1458 = vsel %vm321, %v1435, 0
        %v1461 = vsel %vm321, %v1436, 0
        %v1464 = vsel %vm346, %v1438, 0
        %1466 = vmatprep.subr.bf16.mxu0 0
        %1467 = vmatpush1.bf16.msra.mxu0 %v1464
        %1468 = vmatprep.subr.bf16.mxu0 0
        %1469 = vmatpush1.bf16.msra.mxu0 0
        %1470 = vmatprep.subr.bf16.mxu0 0
        %1471 = vmatpush1.bf16.msra.mxu0 0
        %1472 = vmatprep.subr.bf16.mxu0 0
        %1473 = vmatpush1.bf16.msra.mxu0 0
        %1474 = vmatprep.subr.bf16.mxu0 0
        %1475 = vmatpush1.bf16.msra.mxu0 0
        %1476 = vmatprep.subr.bf16.mxu0 0
        %1477 = vmatpush1.bf16.msra.mxu0 0
        %1478 = vmatprep.subr.bf16.mxu0 0
        %1479 = vmatpush1.bf16.msra.mxu0 0
        %1480 = vmatprep.subr.bf16.mxu0 0
        %1481 = vmatpush1.bf16.msra.mxu0 0
        %1482 = vmatprep.subr.bf16.mxu0 0
        %1483 = vmatpush1.bf16.msra.mxu0 0
        %1484 = vmatprep.subr.bf16.mxu0 0
        %1485 = vmatpush1.bf16.msra.mxu0 0
        %1486 = vmatprep.subr.bf16.mxu0 0
        %1487 = vmatpush1.bf16.msra.mxu0 0
        %1488 = vmatprep.subr.bf16.mxu0 0
        %1489 = vmatpush1.bf16.msra.mxu0 0
        %1490 = vmatprep.subr.bf16.mxu0 0
        %1491 = vmatpush1.bf16.msra.mxu0 0
        %1492 = vmatprep.subr.bf16.mxu0 0
        %1493 = vmatpush1.bf16.msra.mxu0 0
        %1494 = vmatprep.subr.bf16.mxu0 0
        %1495 = vmatpush1.bf16.msra.mxu0 0
        %1496 = vmatprep.subr.bf16.mxu0 0
        %1497 = vmatpush1.bf16.msra.mxu0 0
        %1498 = vmatprep.mubr.bf16.mxu0 0
        %1499 = vmatmul.mubr.bf16.gmra.mrb[0].mxu0 %v1440
        %v1500 = vpop.f32.mrb[0].mxu0
        %v1501 = vadd.f32 0.0, %v1500
        %v1502 = vpop.f32.mrb[0].mxu0
        %v1503 = vpop.f32.mrb[0].mxu0
        %v1504 = vadd.f32 0.0, %v1503
        %v1505 = vpop.f32.mrb[0].mxu0
        %1506 = vmatprep.mubr.bf16.mxu0 0
        %1507 = vmatmul.mubr.bf16.gmra.mrb[0].mxu0 %v1443
        %v1508 = vpop.f32.mrb[0].mxu0
        %v1509 = vadd.f32 0.0, %v1508
        %v1510 = vpop.f32.mrb[0].mxu0
        %v1511 = vpop.f32.mrb[0].mxu0
        %v1512 = vadd.f32 0.0, %v1511
        %v1513 = vpop.f32.mrb[0].mxu0
        %1514 = vmatprep.mubr.bf16.mxu0 0
        %1515 = vmatmul.mubr.bf16.gmra.mrb[0].mxu0 %v1446
        %v1516 = vpop.f32.mrb[0].mxu0
        %v1517 = vadd.f32 0.0, %v1516
        %v1518 = vpop.f32.mrb[0].mxu0
        %v1519 = vpop.f32.mrb[0].mxu0
        %v1520 = vadd.f32 0.0, %v1519
        %v1521 = vpop.f32.mrb[0].mxu0
        %1522 = vmatprep.mubr.bf16.mxu0 0
        %1523 = vmatmul.mubr.bf16.gmra.mrb[0].mxu0 %v1449
        %v1524 = vpop.f32.mrb[0].mxu0
        %v1525 = vadd.f32 0.0, %v1524
        %v1526 = vpop.f32.mrb[0].mxu0
        %v1527 = vpop.f32.mrb[0].mxu0
        %v1528 = vadd.f32 0.0, %v1527
        %v1529 = vpop.f32.mrb[0].mxu0
        %1530 = vmatprep.mubr.bf16.mxu0 0
        %1531 = vmatmul.mubr.bf16.gmra.mrb[0].mxu0 %v1452
        %v1532 = vpop.f32.mrb[0].mxu0
        %v1533 = vadd.f32 0.0, %v1532
        %v1534 = vpop.f32.mrb[0].mxu0
        %v1535 = vpop.f32.mrb[0].mxu0
        %v1536 = vadd.f32 0.0, %v1535
        %v1537 = vpop.f32.mrb[0].mxu0
        %1538 = vmatprep.mubr.bf16.mxu0 0
        %1539 = vmatmul.mubr.bf16.gmra.mrb[0].mxu0 %v1455
        %v1540 = vpop.f32.mrb[0].mxu0
        %v1541 = vadd.f32 0.0, %v1540
        %v1542 = vpop.f32.mrb[0].mxu0
        %v1543 = vpop.f32.mrb[0].mxu0
        %v1544 = vadd.f32 0.0, %v1543
        %v1545 = vpop.f32.mrb[0].mxu0
        %1546 = vmatprep.mubr.bf16.mxu0 0
        %1547 = vmatmul.mubr.bf16.gmra.mrb[0].mxu0 %v1458
        %v1548 = vpop.f32.mrb[0].mxu0
        %v1549 = vadd.f32 0.0, %v1548
        %v1550 = vpop.f32.mrb[0].mxu0
        %v1551 = vpop.f32.mrb[0].mxu0
        %v1552 = vadd.f32 0.0, %v1551
        %v1553 = vpop.f32.mrb[0].mxu0
        %1554 = vmatprep.mubr.bf16.mxu0 0
        %1555 = vmatmul.mubr.bf16.gmra.mrb[0].mxu0 %v1461
        %v1556 = vpop.f32.mrb[0].mxu0
        %v1557 = vadd.f32 0.0, %v1556
        %v1558 = vpop.f32.mrb[0].mxu0
        %v1559 = vpop.f32.mrb[0].mxu0
        %v1560 = vadd.f32 0.0, %v1559
        %v1561 = vpop.f32.mrb[0].mxu0
        %1562 = vdwg.mxu0
        %v1563 = vadd.f32 %v1395, %v1501
        %v1564 = vadd.f32 %v1396, %v1504
        %v1565 = vadd.f32 %v1397, %v1509
        %v1566 = vadd.f32 %v1398, %v1512
        %v1567 = vadd.f32 %v1399, %v1517
        %v1568 = vadd.f32 %v1400, %v1520
        %v1569 = vadd.f32 %v1401, %v1525
        %v1570 = vadd.f32 %v1402, %v1528
        %v1571 = vadd.f32 %v1403, %v1533
        %v1572 = vadd.f32 %v1404, %v1536
        %v1573 = vadd.f32 %v1405, %v1541
        %v1574 = vadd.f32 %v1406, %v1544
        %v1575 = vadd.f32 %v1407, %v1549
        %v1576 = vadd.f32 %v1408, %v1552
        %v1577 = vadd.f32 %v1409, %v1557
        %v1578 = vadd.f32 %v1410, %v1560
        %s1579 = sadd.s32 %s266, 38
        %s1580 = scalar_lea.vmem %s253, %s1579
        %v1581 = vld [vmem:[%s1580] sm:$0xff]
        %v1582 = vld [vmem:[%s1580 + $0x8] sm:$0xff]
        %v1583 = vld [vmem:[%s1580 + $0x10] sm:$0xff]
        %v1584 = vld [vmem:[%s1580 + $0x18] sm:$0xff]
        %v1585 = vld [vmem:[%s1580 + $0x20] sm:$0xff]
        %v1586 = vld [vmem:[%s1580 + $0x28] sm:$0xff]
        %v1587 = vld [vmem:[%s1580 + $0x30] sm:$0xff]
        %v1588 = vld [vmem:[%s1580 + $0x38] sm:$0xff]
        %v1589 = vld [vmem:[%s1580 + $0x40] sm:$0xff]
        %v1590 = vld [vmem:[%s1580 + $0x48] sm:$0xff]
        %v1591 = vld [vmem:[%s1580 + $0x50] sm:$0xff]
        %v1592 = vld [vmem:[%s1580 + $0x58] sm:$0xff]
        %v1593 = vld [vmem:[%s1580 + $0x60] sm:$0xff]
        %v1594 = vld [vmem:[%s1580 + $0x68] sm:$0xff]
        %v1595 = vld [vmem:[%s1580 + $0x70] sm:$0xff]
        %v1596 = vld [vmem:[%s1580 + $0x78] sm:$0xff]
        %v1597 = vpack.c.bf16 %v1582, %v1581
        %v1598 = vpack.c.bf16 %v1584, %v1583
        %v1599 = vpack.c.bf16 %v1586, %v1585
        %v1600 = vpack.c.bf16 %v1588, %v1587
        %v1601 = vpack.c.bf16 %v1590, %v1589
        %v1602 = vpack.c.bf16 %v1592, %v1591
        %v1603 = vpack.c.bf16 %v1594, %v1593
        %v1604 = vpack.c.bf16 %v1596, %v1595
        %s1605 = scalar_lea.vmem %s257, 16
        %v1606 = vld [vmem:[%s1605] sm:$0x3]
        %v1608 = vsel %vm321, %v1597, 0
        %v1611 = vsel %vm321, %v1598, 0
        %v1614 = vsel %vm321, %v1599, 0
        %v1617 = vsel %vm321, %v1600, 0
        %v1620 = vsel %vm321, %v1601, 0
        %v1623 = vsel %vm321, %v1602, 0
        %v1626 = vsel %vm321, %v1603, 0
        %v1629 = vsel %vm321, %v1604, 0
        %v1632 = vsel %vm346, %v1606, 0
        %1634 = vmatprep.subr.bf16.mxu0 0
        %1635 = vmatpush1.bf16.msra.mxu0 %v1632
        %1636 = vmatprep.subr.bf16.mxu0 0
        %1637 = vmatpush1.bf16.msra.mxu0 0
        %1638 = vmatprep.subr.bf16.mxu0 0
        %1639 = vmatpush1.bf16.msra.mxu0 0
        %1640 = vmatprep.subr.bf16.mxu0 0
        %1641 = vmatpush1.bf16.msra.mxu0 0
        %1642 = vmatprep.subr.bf16.mxu0 0
        %1643 = vmatpush1.bf16.msra.mxu0 0
        %1644 = vmatprep.subr.bf16.mxu0 0
        %1645 = vmatpush1.bf16.msra.mxu0 0
        %1646 = vmatprep.subr.bf16.mxu0 0
        %1647 = vmatpush1.bf16.msra.mxu0 0
        %1648 = vmatprep.subr.bf16.mxu0 0
        %1649 = vmatpush1.bf16.msra.mxu0 0
        %1650 = vmatprep.subr.bf16.mxu0 0
        %1651 = vmatpush1.bf16.msra.mxu0 0
        %1652 = vmatprep.subr.bf16.mxu0 0
        %1653 = vmatpush1.bf16.msra.mxu0 0
        %1654 = vmatprep.subr.bf16.mxu0 0
        %1655 = vmatpush1.bf16.msra.mxu0 0
        %1656 = vmatprep.subr.bf16.mxu0 0
        %1657 = vmatpush1.bf16.msra.mxu0 0
        %1658 = vmatprep.subr.bf16.mxu0 0
        %1659 = vmatpush1.bf16.msra.mxu0 0
        %1660 = vmatprep.subr.bf16.mxu0 0
        %1661 = vmatpush1.bf16.msra.mxu0 0
        %1662 = vmatprep.subr.bf16.mxu0 0
        %1663 = vmatpush1.bf16.msra.mxu0 0
        %1664 = vmatprep.subr.bf16.mxu0 0
        %1665 = vmatpush1.bf16.msra.mxu0 0
        %1666 = vmatprep.mubr.bf16.mxu0 0
        %1667 = vmatmul.mubr.bf16.gmra.mrb[0].mxu0 %v1608
        %v1668 = vpop.f32.mrb[0].mxu0
        %v1669 = vadd.f32 0.0, %v1668
        %v1670 = vpop.f32.mrb[0].mxu0
        %v1671 = vpop.f32.mrb[0].mxu0
        %v1672 = vadd.f32 0.0, %v1671
        %v1673 = vpop.f32.mrb[0].mxu0
        %1674 = vmatprep.mubr.bf16.mxu0 0
        %1675 = vmatmul.mubr.bf16.gmra.mrb[0].mxu0 %v1611
        %v1676 = vpop.f32.mrb[0].mxu0
        %v1677 = vadd.f32 0.0, %v1676
        %v1678 = vpop.f32.mrb[0].mxu0
        %v1679 = vpop.f32.mrb[0].mxu0
        %v1680 = vadd.f32 0.0, %v1679
        %v1681 = vpop.f32.mrb[0].mxu0
        %1682 = vmatprep.mubr.bf16.mxu0 0
        %1683 = vmatmul.mubr.bf16.gmra.mrb[0].mxu0 %v1614
        %v1684 = vpop.f32.mrb[0].mxu0
        %v1685 = vadd.f32 0.0, %v1684
        %v1686 = vpop.f32.mrb[0].mxu0
        %v1687 = vpop.f32.mrb[0].mxu0
        %v1688 = vadd.f32 0.0, %v1687
        %v1689 = vpop.f32.mrb[0].mxu0
        %1690 = vmatprep.mubr.bf16.mxu0 0
        %1691 = vmatmul.mubr.bf16.gmra.mrb[0].mxu0 %v1617
        %v1692 = vpop.f32.mrb[0].mxu0
        %v1693 = vadd.f32 0.0, %v1692
        %v1694 = vpop.f32.mrb[0].mxu0
        %v1695 = vpop.f32.mrb[0].mxu0
        %v1696 = vadd.f32 0.0, %v1695
        %v1697 = vpop.f32.mrb[0].mxu0
        %1698 = vmatprep.mubr.bf16.mxu0 0
        %1699 = vmatmul.mubr.bf16.gmra.mrb[0].mxu0 %v1620
        %v1700 = vpop.f32.mrb[0].mxu0
        %v1701 = vadd.f32 0.0, %v1700
        %v1702 = vpop.f32.mrb[0].mxu0
        %v1703 = vpop.f32.mrb[0].mxu0
        %v1704 = vadd.f32 0.0, %v1703
        %v1705 = vpop.f32.mrb[0].mxu0
        %1706 = vmatprep.mubr.bf16.mxu0 0
        %1707 = vmatmul.mubr.bf16.gmra.mrb[0].mxu0 %v1623
        %v1708 = vpop.f32.mrb[0].mxu0
        %v1709 = vadd.f32 0.0, %v1708
        %v1710 = vpop.f32.mrb[0].mxu0
        %v1711 = vpop.f32.mrb[0].mxu0
        %v1712 = vadd.f32 0.0, %v1711
        %v1713 = vpop.f32.mrb[0].mxu0
        %1714 = vmatprep.mubr.bf16.mxu0 0
        %1715 = vmatmul.mubr.bf16.gmra.mrb[0].mxu0 %v1626
        %v1716 = vpop.f32.mrb[0].mxu0
        %v1717 = vadd.f32 0.0, %v1716
        %v1718 = vpop.f32.mrb[0].mxu0
        %v1719 = vpop.f32.mrb[0].mxu0
        %v1720 = vadd.f32 0.0, %v1719
        %v1721 = vpop.f32.mrb[0].mxu0
        %1722 = vmatprep.mubr.bf16.mxu0 0
        %1723 = vmatmul.mubr.bf16.gmra.mrb[0].mxu0 %v1629
        %v1724 = vpop.f32.mrb[0].mxu0
        %v1725 = vadd.f32 0.0, %v1724
        %v1726 = vpop.f32.mrb[0].mxu0
        %v1727 = vpop.f32.mrb[0].mxu0
        %v1728 = vadd.f32 0.0, %v1727
        %v1729 = vpop.f32.mrb[0].mxu0
        %1730 = vdwg.mxu0
        %v1731 = vadd.f32 %v1563, %v1669
        %v1732 = vadd.f32 %v1564, %v1672
        %v1733 = vadd.f32 %v1565, %v1677
        %v1734 = vadd.f32 %v1566, %v1680
        %v1735 = vadd.f32 %v1567, %v1685
        %v1736 = vadd.f32 %v1568, %v1688
        %v1737 = vadd.f32 %v1569, %v1693
        %v1738 = vadd.f32 %v1570, %v1696
        %v1739 = vadd.f32 %v1571, %v1701
        %v1740 = vadd.f32 %v1572, %v1704
        %v1741 = vadd.f32 %v1573, %v1709
        %v1742 = vadd.f32 %v1574, %v1712
        %v1743 = vadd.f32 %v1575, %v1717
        %v1744 = vadd.f32 %v1576, %v1720
        %v1745 = vadd.f32 %v1577, %v1725
        %v1746 = vadd.f32 %v1578, %v1728
        %v1747 = vld [vmem:[%s260] sm:$0x1]
        %v1749 = vlaneseq
        %v1750 = vshrl.u32 %v1749, 7
        %v1751 = vsub.s32 0, %v1750
        %v1752 = vrot.slane %v1747, %v1751
        %v1754 = vmul.f32 %v1731, %v1752
        %v1755 = vmul.f32 %v1732, %v1752
        %v1756 = vmul.f32 %v1733, %v1752
        %v1757 = vmul.f32 %v1734, %v1752
        %v1758 = vmul.f32 %v1735, %v1752
        %v1759 = vmul.f32 %v1736, %v1752
        %v1760 = vmul.f32 %v1737, %v1752
        %v1761 = vmul.f32 %v1738, %v1752
        %v1762 = vmul.f32 %v1739, %v1752
        %v1763 = vmul.f32 %v1740, %v1752
        %v1764 = vmul.f32 %v1741, %v1752
        %v1765 = vmul.f32 %v1742, %v1752
        %v1766 = vmul.f32 %v1743, %v1752
        %v1767 = vmul.f32 %v1744, %v1752
        %v1768 = vmul.f32 %v1745, %v1752
        %v1769 = vmul.f32 %v1746, %v1752
        %v1770 = vld [vmem:[%s263] sm:$0x1]
        %v1772 = vlaneseq
        %v1773 = vshrl.u32 %v1772, 7
        %v1774 = vsub.s32 0, %v1773
        %v1775 = vrot.slane %v1770, %v1774
        %v1777 = vadd.f32 %v1754, %v1775
        %v1778 = vadd.f32 %v1755, %v1775
        %v1779 = vadd.f32 %v1756, %v1775
        %v1780 = vadd.f32 %v1757, %v1775
        %v1781 = vadd.f32 %v1758, %v1775
        %v1782 = vadd.f32 %v1759, %v1775
        %v1783 = vadd.f32 %v1760, %v1775
        %v1784 = vadd.f32 %v1761, %v1775
        %v1785 = vadd.f32 %v1762, %v1775
        %v1786 = vadd.f32 %v1763, %v1775
        %v1787 = vadd.f32 %v1764, %v1775
        %v1788 = vadd.f32 %v1765, %v1775
        %v1789 = vadd.f32 %v1766, %v1775
        %v1790 = vadd.f32 %v1767, %v1775
        %v1791 = vadd.f32 %v1768, %v1775
        %v1792 = vadd.f32 %v1769, %v1775
        %v1793 = vmax.f32 %v1777, 0.0
        %v1794 = vmax.f32 %v1778, 0.0
        %v1795 = vmax.f32 %v1779, 0.0
        %v1796 = vmax.f32 %v1780, 0.0
        %v1797 = vmax.f32 %v1781, 0.0
        %v1798 = vmax.f32 %v1782, 0.0
        %v1799 = vmax.f32 %v1783, 0.0
        %v1800 = vmax.f32 %v1784, 0.0
        %v1801 = vmax.f32 %v1785, 0.0
        %v1802 = vmax.f32 %v1786, 0.0
        %v1803 = vmax.f32 %v1787, 0.0
        %v1804 = vmax.f32 %v1788, 0.0
        %v1805 = vmax.f32 %v1789, 0.0
        %v1806 = vmax.f32 %v1790, 0.0
        %v1807 = vmax.f32 %v1791, 0.0
        %v1808 = vmax.f32 %v1792, 0.0
        %1809 = vst [vmem:[%s248] sm:$0xff] %v1793
        %1810 = vst [vmem:[%s248 + $0x8] sm:$0xff] %v1794
        %1811 = vst [vmem:[%s248 + $0x10] sm:$0xff] %v1795
        %1812 = vst [vmem:[%s248 + $0x18] sm:$0xff] %v1796
        %1813 = vst [vmem:[%s248 + $0x20] sm:$0xff] %v1797
        %1814 = vst [vmem:[%s248 + $0x28] sm:$0xff] %v1798
        %1815 = vst [vmem:[%s248 + $0x30] sm:$0xff] %v1799
        %1816 = vst [vmem:[%s248 + $0x38] sm:$0xff] %v1800
        %1817 = vst [vmem:[%s248 + $0x40] sm:$0xff] %v1801
        %1818 = vst [vmem:[%s248 + $0x48] sm:$0xff] %v1802
        %1819 = vst [vmem:[%s248 + $0x50] sm:$0xff] %v1803
        %1820 = vst [vmem:[%s248 + $0x58] sm:$0xff] %v1804
        %1821 = vst [vmem:[%s248 + $0x60] sm:$0xff] %v1805
        %1822 = vst [vmem:[%s248 + $0x68] sm:$0xff] %v1806
        %1823 = vst [vmem:[%s248 + $0x70] sm:$0xff] %v1807
        %1824 = vst [vmem:[%s248 + $0x78] sm:$0xff] %v1808
        %s1825 = sand.u32 %s153, 1
        %s1826 = scalar_lea.sflag [#allocation3], %s1825
        %s1827 = sand.u32 %s153, 1
        %s1828 = smul.addr %s1827, 128
        %s1829 = scalar_lea.vmem [#allocation2], %s1828
        // Predicated region
        $region37: #{tpu_custom_call.1} parent=35 // pred_check
          %p1830 = pneg %p163
        $region38: #{tpu_custom_call.1} parent=35 // pred_check_branch
          %1832 = sbr.rel (%p1830) target = $region40
        $region39: #{tpu_custom_call.1} parent=35 // pred_region
          %s1833 = smul.u32 16, %s25
          %s1835 = ssub.s32 2048, 2048
          %1836 = vsyncadd %s1826, %s1835
          %s1837 = sadd.s32 %s24, %s1833
          %s1838 = smul.addr %s23, 48
          %s1839 = sadd.s32 %s1837, %s1838
          %s1840 = smul.addr %s1839, 128
          %s1841 = scalar_lea.hbm %s4, %s1840
          %s1842 = sshll.u32 %s1829, 4
          %s1843 = int_to_ptr.vmem [resolvable:$true] %s1842
          %1848 = dma.vmem_to_hbm [thread:$0]  %s1843, 2048, %s1841, %s1826, 128, 128, 8
        $region40: #{tpu_custom_call.1} parent=35 // pred_fallthru
          _
      $region36: #{tpu_custom_call.1} parent=5 // pred_fallthru
        _
      %p1849 = scmp.le.s32.totalorder 2, %s13
      // Predicated region
      $region41: #{tpu_custom_call.1} parent=5 // pred_check
        %p1850 = pneg %p1849
      $region42: #{tpu_custom_call.1} parent=5 // pred_check_branch
        %1852 = sbr.rel (%p1850) target = $region44
      $region43: #{tpu_custom_call.1} parent=5 // pred_region
        %s1853 = ssub.s32 %s13, 2
        // Predicated region
        $region45: #{tpu_custom_call.1} parent=43 // pred_check
          %p1854 = pneg %p169
        $region46: #{tpu_custom_call.1} parent=43 // pred_check_branch
          %1856 = sbr.rel (%p1854) target = $region48
        $region47: #{tpu_custom_call.1} parent=43 // pred_region
          %s1857 = sand.u32 %s154, 1
          %s1858 = scalar_lea.sflag [#allocation3], %s1857
          %s1859 = sand.u32 %s154, 1
          %s1860 = smul.addr %s1859, 128
          %s1861 = scalar_lea.vmem [#allocation2], %s1860
          %1862 = dma.done %s1858, 2048
        $region48: #{tpu_custom_call.1} parent=43 // pred_fallthru
          _
      $region44: #{tpu_custom_call.1} parent=5 // pred_fallthru
        _
    $region6: #{tpu_custom_call.1} parent=1 // loop_footer
      %s17 = sadd.s32 1, %s13
    $region7: #{tpu_custom_call.1} parent=1 // loop_footer_branch
      %12 = sbr.rel target = $region3
    $region8: #{tpu_custom_call.1} parent=1 // loop_exit
      _
    %1863 = vsyncpa [#allocation3], 1
    %s1864 = scalar_lea.sflag [#allocation3], 1
    %1865 = vsyncpa %s1864, 1

</llo_original>
